<compile_context>
chip_gen: v7x
topology: tpu7x:2x2x1
jax: 0.10.0
libtpu: 0.0.40
codegen_flags: <defaults>
</compile_context>

<pallas_src>
import functools

import jax
import jax.numpy as jnp
from jax.experimental import pallas as pl
from jax.experimental.pallas import tpu as pltpu


def _biaffine_kernel(h_ref, v_ref, w_ref, o_ref, *, out_head_dim, in_head_dim):
    # h_ref : (1, 1, TL, in_hd)
    # v_ref : (1, 1, TK, in_hd)
    # w_ref : (1, in_hd, out_hd * in_hd)   (W_flat[x, d*in_hd + y] = W[d, x, y])
    # o_ref : (1, 1, out_hd, TL, TK)
    A = h_ref[0, 0]                      # (TL, in_hd)
    V = v_ref[0, 0]                      # (TK, in_hd)
    Wf = w_ref[0]                        # (in_hd, out_hd * in_hd)

    # Fused first contraction across all output channels: one wide matmul.
    #   T_all[l, d*in_hd + y] = sum_x A[l, x] * W[d, x, y]
    T_all = jnp.dot(A, Wf, preferred_element_type=jnp.float32)   # (TL, out_hd*in_hd)

    # Second contraction per output channel; contract y via dot_general so V
    # is never transposed/copied inside the (statically unrolled) loop.
    for d in range(out_head_dim):        # out_head_dim is small -> static unroll
        Td = T_all[:, d * in_head_dim:(d + 1) * in_head_dim]     # (TL, in_hd)
        o_ref[0, 0, d] = jax.lax.dot_general(
            Td, V,
            dimension_numbers=(((1,), (1,)), ((), ())),
            preferred_element_type=jnp.float32)                  # (TL, TK)


def _pick_tile(l_pad, out_hd, in_hd, budget_bytes=36 << 20):
    """Largest tile in {512, 256, 128} that divides l_pad and keeps the
    double-buffered per-step VMEM footprint under budget."""
    for t in (512, 256, 128):
        if l_pad % t != 0:
            continue
        elems = out_hd * t * t + 2 * t * in_hd + in_hd * out_hd * in_hd
        if 2 * elems * 4 <= budget_bytes:      # x2 for double buffering, f32
            return t
    return 128


def multi_head_biaffine(h, v, W, n_head):
    """Pallas implementation of MultiHeadBiaffine.forward.

    h, v : (bsz, max_len, dim) float32
    W    : (n_head, out_head_dim, in_head_dim, in_head_dim) float32
    returns (bsz, n_head * out_head_dim, max_len, max_len) float32
    """
    bsz, max_len, dim = h.shape
    assert dim % n_head == 0
    in_hd = dim // n_head
    n_head_w, out_hd, in_hd_w, _ = W.shape
    assert n_head_w == n_head and in_hd_w == in_hd

    # Pad sequence length to a multiple of 128 -> lane-dense, unmasked output
    # stores (and clean (8,128)-aligned tiles). Padded rows are zero and are
    # sliced away at the end.
    l_pad = pl.cdiv(max_len, 128) * 128
    if l_pad != max_len:
        pad = l_pad - max_len
        h = jnp.pad(h, ((0, 0), (0, pad), (0, 0)))
        v = jnp.pad(v, ((0, 0), (0, pad), (0, 0)))

    # Head split (small, parameter/input-sized glue; dominant cost is the
    # L^2 output writeback inside the kernel).
    hh = h.reshape(bsz, l_pad, n_head, in_hd).transpose(0, 2, 1, 3)   # (B,H,L,x)
    vv = v.reshape(bsz, l_pad, n_head, in_hd).transpose(0, 2, 1, 3)   # (B,H,L,y)
    # W_flat[h, x, d*in_hd + y] = W[h, d, x, y]  -> (n_head, in_hd, out_hd*in_hd)
    w_flat = W.transpose(0, 2, 1, 3).reshape(n_head, in_hd, out_hd * in_hd)

    tile = _pick_tile(l_pad, out_hd, in_hd)
    n_t = l_pad // tile

    kernel = functools.partial(_biaffine_kernel,
                               out_head_dim=out_hd, in_head_dim=in_hd)

    out = pl.pallas_call(
        kernel,
        out_shape=jax.ShapeDtypeStruct((bsz, n_head, out_hd, l_pad, l_pad),
                                       jnp.float32),
        # head outermost so the W block stays resident across all inner axes;
        # k-tile innermost so the h (row) block is reused across column tiles.
        grid=(n_head, bsz, n_t, n_t),
        in_specs=[
            pl.BlockSpec((1, 1, tile, in_hd),
                         lambda hd, b, li, ki: (b, hd, li, 0)),
            pl.BlockSpec((1, 1, tile, in_hd),
                         lambda hd, b, li, ki: (b, hd, ki, 0)),
            pl.BlockSpec((1, in_hd, out_hd * in_hd),
                         lambda hd, b, li, ki: (hd, 0, 0)),
        ],
        out_specs=pl.BlockSpec((1, 1, out_hd, tile, tile),
                               lambda hd, b, li, ki: (b, hd, 0, li, ki)),
        compiler_params=pltpu.CompilerParams(
            # every grid point writes a distinct output block -> all parallel
            dimension_semantics=("parallel", "parallel", "parallel", "parallel"),
            # tiles are sized to ~<=18 MiB double-buffered; 48 MiB cap leaves
            # headroom on v7x (64 MiB physical) and lifts v5e's 16 MiB default.
            vmem_limit_bytes=48 << 20),
    )(hh, vv, w_flat)

    # (bsz, n_head, out_hd, L, L) -> (bsz, out_dim, L, L): matches torch's
    # 'bhdlk' -> reshape(bsz, out_dim, L, L).
    out = out.reshape(bsz, n_head * out_hd, l_pad, l_pad)
    if l_pad != max_len:
        out = out[:, :, :max_len, :max_len]
    return out


def _reference(h, v, W):
    bsz, max_len, dim = h.shape
    n_head, out_hd, in_hd, _ = W.shape
    hr = h.reshape(bsz, max_len, n_head, in_hd)
    vr = v.reshape(bsz, max_len, n_head, in_hd)
    w = jnp.einsum('blhx,hdxy,bkhy->bhdlk', hr, W, vr)
    return w.reshape(bsz, n_head * out_hd, max_len, max_len)


if __name__ == "__main__":
    # small shapes consistent with the module
    bsz, max_len, dim = 2, 8, 32
    n_head = 4
    out_dim = dim                       # out=None path in the module
    in_hd = dim // n_head               # 8
    out_hd = out_dim // n_head          # 8

    key = jax.random.PRNGKey(0)
    kh, kv, kw = jax.random.split(key, 3)

    h = jax.random.normal(kh, (bsz, max_len, dim), dtype=jnp.float32)
    v = jax.random.normal(kv, (bsz, max_len, dim), dtype=jnp.float32)

    # deterministic xavier_normal-like init for W (n_head, out_hd, in_hd, in_hd)
    fan_in = out_hd * in_hd * in_hd
    fan_out = n_head * in_hd * in_hd
    std = (2.0 / (fan_in + fan_out)) ** 0.5
    W = std * jax.random.normal(kw, (n_head, out_hd, in_hd, in_hd), dtype=jnp.float32)

    out = multi_head_biaffine(h, v, W, n_head)
    out = jax.block_until_ready(out)

    ref = _reference(h, v, W)
    assert out.shape == (bsz, out_dim, max_len, max_len), out.shape
    assert jnp.allclose(out, ref, atol=1e-5, rtol=1e-5), float(jnp.abs(out - ref).max())

    print("KERNEL_OK")
</pallas_src>

<mosaic_0001>
module attributes {stable_mosaic.version = 11 : i64} {
  func.func @_biaffine_kernel(%arg0: i32, %arg1: i32, %arg2: i32, %arg3: i32, %arg4: memref<1x1x128x8xf32, #tpu.memory_space<vmem>>, %arg5: memref<1x1x128x8xf32, #tpu.memory_space<vmem>>, %arg6: memref<1x8x64xf32, #tpu.memory_space<vmem>>, %arg7: memref<1x1x8x128x128xf32, #tpu.memory_space<vmem>>) attributes {dimension_semantics = [#tpu.dimension_semantics<parallel>, #tpu.dimension_semantics<parallel>, #tpu.dimension_semantics<parallel>, #tpu.dimension_semantics<parallel>], iteration_bounds = array<i64: 4, 2, 1, 1>, scalar_prefetch = 0 : i64, scratch_operands = 0 : i64, tpu.core_type = #tpu.core_type<tc>, window_params = [{transform_indices = @transform_0, window_bounds = array<i64: 1, 1, 128, 8>}, {transform_indices = @transform_1, window_bounds = array<i64: 1, 1, 128, 8>}, {transform_indices = @transform_2, window_bounds = array<i64: 1, 8, 64>}, {transform_indices = @transform_3, window_bounds = array<i64: 1, 1, 8, 128, 128>}]} {
    %c0 = arith.constant 0 : index
    %c0_0 = arith.constant 0 : index
    %c0_1 = arith.constant 0 : index
    %c0_2 = arith.constant 0 : index
    %0 = vector.load %arg4[%c0, %c0_0, %c0_1, %c0_2] : memref<1x1x128x8xf32, #tpu.memory_space<vmem>>, vector<1x1x128x8xf32>
    %1 = vector.shape_cast %0 : vector<1x1x128x8xf32> to vector<128x8xf32>
    %c0_3 = arith.constant 0 : index
    %c0_4 = arith.constant 0 : index
    %c0_5 = arith.constant 0 : index
    %c0_6 = arith.constant 0 : index
    %2 = vector.load %arg5[%c0_3, %c0_4, %c0_5, %c0_6] : memref<1x1x128x8xf32, #tpu.memory_space<vmem>>, vector<1x1x128x8xf32>
    %3 = vector.shape_cast %2 : vector<1x1x128x8xf32> to vector<128x8xf32>
    %c0_7 = arith.constant 0 : index
    %c0_8 = arith.constant 0 : index
    %c0_9 = arith.constant 0 : index
    %4 = vector.load %arg6[%c0_7, %c0_8, %c0_9] : memref<1x8x64xf32, #tpu.memory_space<vmem>>, vector<1x8x64xf32>
    %5 = vector.shape_cast %4 : vector<1x8x64xf32> to vector<8x64xf32>
    %cst = arith.constant dense<0.000000e+00> : vector<128x64xf32>
    %6 = tpu.matmul %1, %5, %cst {dimension_numbers = #tpu.dot_dimension_numbers<[1], [0], [0], [1], [0, 0, 1, 1], [], []>} : vector<128x8xf32>, vector<8x64xf32>, vector<128x64xf32> -> vector<128x64xf32>
    %7 = vector.extract_strided_slice %6 {offsets = [0, 0], sizes = [128, 8], strides = [1, 1]} : vector<128x64xf32> to vector<128x8xf32>
    %cst_10 = arith.constant dense<0.000000e+00> : vector<128x128xf32>
    %8 = tpu.matmul %7, %3, %cst_10 {dimension_numbers = #tpu.dot_dimension_numbers<[1], [1], [0], [0], [0, 0, 1, 0], [], []>} : vector<128x8xf32>, vector<128x8xf32>, vector<128x128xf32> -> vector<128x128xf32>
    %c0_11 = arith.constant 0 : index
    %c0_12 = arith.constant 0 : index
    %c0_13 = arith.constant 0 : index
    %c0_14 = arith.constant 0 : index
    %c0_15 = arith.constant 0 : index
    %9 = vector.load %arg7[%c0_11, %c0_12, %c0_13, %c0_14, %c0_15] : memref<1x1x8x128x128xf32, #tpu.memory_space<vmem>>, vector<1x1x1x128x128xf32>
    %10 = vector.shape_cast %9 : vector<1x1x1x128x128xf32> to vector<128x128xf32>
    %11 = vector.shape_cast %8 : vector<128x128xf32> to vector<1x1x1x128x128xf32>
    tpu.vector_store %arg7[%c0_11, %c0_12, %c0_13, %c0_14, %c0_15], %11 {strides = array<i32>} : memref<1x1x8x128x128xf32, #tpu.memory_space<vmem>>, vector<1x1x1x128x128xf32>,
    %12 = vector.extract_strided_slice %6 {offsets = [0, 8], sizes = [128, 8], strides = [1, 1]} : vector<128x64xf32> to vector<128x8xf32>
    %cst_16 = arith.constant dense<0.000000e+00> : vector<128x128xf32>
    %13 = tpu.matmul %12, %3, %cst_16 {dimension_numbers = #tpu.dot_dimension_numbers<[1], [1], [0], [0], [0, 0, 1, 0], [], []>} : vector<128x8xf32>, vector<128x8xf32>, vector<128x128xf32> -> vector<128x128xf32>
    %c0_17 = arith.constant 0 : index
    %c0_18 = arith.constant 0 : index
    %c1 = arith.constant 1 : index
    %c0_19 = arith.constant 0 : index
    %c0_20 = arith.constant 0 : index
    %14 = vector.load %arg7[%c0_17, %c0_18, %c1, %c0_19, %c0_20] : memref<1x1x8x128x128xf32, #tpu.memory_space<vmem>>, vector<1x1x1x128x128xf32>
    %15 = vector.shape_cast %14 : vector<1x1x1x128x128xf32> to vector<128x128xf32>
    %16 = vector.shape_cast %13 : vector<128x128xf32> to vector<1x1x1x128x128xf32>
    tpu.vector_store %arg7[%c0_17, %c0_18, %c1, %c0_19, %c0_20], %16 {strides = array<i32>} : memref<1x1x8x128x128xf32, #tpu.memory_space<vmem>>, vector<1x1x1x128x128xf32>,
    %17 = vector.extract_strided_slice %6 {offsets = [0, 16], sizes = [128, 8], strides = [1, 1]} : vector<128x64xf32> to vector<128x8xf32>
    %cst_21 = arith.constant dense<0.000000e+00> : vector<128x128xf32>
    %18 = tpu.matmul %17, %3, %cst_21 {dimension_numbers = #tpu.dot_dimension_numbers<[1], [1], [0], [0], [0, 0, 1, 0], [], []>} : vector<128x8xf32>, vector<128x8xf32>, vector<128x128xf32> -> vector<128x128xf32>
    %c0_22 = arith.constant 0 : index
    %c0_23 = arith.constant 0 : index
    %c2 = arith.constant 2 : index
    %c0_24 = arith.constant 0 : index
    %c0_25 = arith.constant 0 : index
    %19 = vector.load %arg7[%c0_22, %c0_23, %c2, %c0_24, %c0_25] : memref<1x1x8x128x128xf32, #tpu.memory_space<vmem>>, vector<1x1x1x128x128xf32>
    %20 = vector.shape_cast %19 : vector<1x1x1x128x128xf32> to vector<128x128xf32>
    %21 = vector.shape_cast %18 : vector<128x128xf32> to vector<1x1x1x128x128xf32>
    tpu.vector_store %arg7[%c0_22, %c0_23, %c2, %c0_24, %c0_25], %21 {strides = array<i32>} : memref<1x1x8x128x128xf32, #tpu.memory_space<vmem>>, vector<1x1x1x128x128xf32>,
    %22 = vector.extract_strided_slice %6 {offsets = [0, 24], sizes = [128, 8], strides = [1, 1]} : vector<128x64xf32> to vector<128x8xf32>
    %cst_26 = arith.constant dense<0.000000e+00> : vector<128x128xf32>
    %23 = tpu.matmul %22, %3, %cst_26 {dimension_numbers = #tpu.dot_dimension_numbers<[1], [1], [0], [0], [0, 0, 1, 0], [], []>} : vector<128x8xf32>, vector<128x8xf32>, vector<128x128xf32> -> vector<128x128xf32>
    %c0_27 = arith.constant 0 : index
    %c0_28 = arith.constant 0 : index
    %c3 = arith.constant 3 : index
    %c0_29 = arith.constant 0 : index
    %c0_30 = arith.constant 0 : index
    %24 = vector.load %arg7[%c0_27, %c0_28, %c3, %c0_29, %c0_30] : memref<1x1x8x128x128xf32, #tpu.memory_space<vmem>>, vector<1x1x1x128x128xf32>
    %25 = vector.shape_cast %24 : vector<1x1x1x128x128xf32> to vector<128x128xf32>
    %26 = vector.shape_cast %23 : vector<128x128xf32> to vector<1x1x1x128x128xf32>
    tpu.vector_store %arg7[%c0_27, %c0_28, %c3, %c0_29, %c0_30], %26 {strides = array<i32>} : memref<1x1x8x128x128xf32, #tpu.memory_space<vmem>>, vector<1x1x1x128x128xf32>,
    %27 = vector.extract_strided_slice %6 {offsets = [0, 32], sizes = [128, 8], strides = [1, 1]} : vector<128x64xf32> to vector<128x8xf32>
    %cst_31 = arith.constant dense<0.000000e+00> : vector<128x128xf32>
    %28 = tpu.matmul %27, %3, %cst_31 {dimension_numbers = #tpu.dot_dimension_numbers<[1], [1], [0], [0], [0, 0, 1, 0], [], []>} : vector<128x8xf32>, vector<128x8xf32>, vector<128x128xf32> -> vector<128x128xf32>
    %c0_32 = arith.constant 0 : index
    %c0_33 = arith.constant 0 : index
    %c4 = arith.constant 4 : index
    %c0_34 = arith.constant 0 : index
    %c0_35 = arith.constant 0 : index
    %29 = vector.load %arg7[%c0_32, %c0_33, %c4, %c0_34, %c0_35] : memref<1x1x8x128x128xf32, #tpu.memory_space<vmem>>, vector<1x1x1x128x128xf32>
    %30 = vector.shape_cast %29 : vector<1x1x1x128x128xf32> to vector<128x128xf32>
    %31 = vector.shape_cast %28 : vector<128x128xf32> to vector<1x1x1x128x128xf32>
    tpu.vector_store %arg7[%c0_32, %c0_33, %c4, %c0_34, %c0_35], %31 {strides = array<i32>} : memref<1x1x8x128x128xf32, #tpu.memory_space<vmem>>, vector<1x1x1x128x128xf32>,
    %32 = vector.extract_strided_slice %6 {offsets = [0, 40], sizes = [128, 8], strides = [1, 1]} : vector<128x64xf32> to vector<128x8xf32>
    %cst_36 = arith.constant dense<0.000000e+00> : vector<128x128xf32>
    %33 = tpu.matmul %32, %3, %cst_36 {dimension_numbers = #tpu.dot_dimension_numbers<[1], [1], [0], [0], [0, 0, 1, 0], [], []>} : vector<128x8xf32>, vector<128x8xf32>, vector<128x128xf32> -> vector<128x128xf32>
    %c0_37 = arith.constant 0 : index
    %c0_38 = arith.constant 0 : index
    %c5 = arith.constant 5 : index
    %c0_39 = arith.constant 0 : index
    %c0_40 = arith.constant 0 : index
    %34 = vector.load %arg7[%c0_37, %c0_38, %c5, %c0_39, %c0_40] : memref<1x1x8x128x128xf32, #tpu.memory_space<vmem>>, vector<1x1x1x128x128xf32>
    %35 = vector.shape_cast %34 : vector<1x1x1x128x128xf32> to vector<128x128xf32>
    %36 = vector.shape_cast %33 : vector<128x128xf32> to vector<1x1x1x128x128xf32>
    tpu.vector_store %arg7[%c0_37, %c0_38, %c5, %c0_39, %c0_40], %36 {strides = array<i32>} : memref<1x1x8x128x128xf32, #tpu.memory_space<vmem>>, vector<1x1x1x128x128xf32>,
    %37 = vector.extract_strided_slice %6 {offsets = [0, 48], sizes = [128, 8], strides = [1, 1]} : vector<128x64xf32> to vector<128x8xf32>
    %cst_41 = arith.constant dense<0.000000e+00> : vector<128x128xf32>
    %38 = tpu.matmul %37, %3, %cst_41 {dimension_numbers = #tpu.dot_dimension_numbers<[1], [1], [0], [0], [0, 0, 1, 0], [], []>} : vector<128x8xf32>, vector<128x8xf32>, vector<128x128xf32> -> vector<128x128xf32>
    %c0_42 = arith.constant 0 : index
    %c0_43 = arith.constant 0 : index
    %c6 = arith.constant 6 : index
    %c0_44 = arith.constant 0 : index
    %c0_45 = arith.constant 0 : index
    %39 = vector.load %arg7[%c0_42, %c0_43, %c6, %c0_44, %c0_45] : memref<1x1x8x128x128xf32, #tpu.memory_space<vmem>>, vector<1x1x1x128x128xf32>
    %40 = vector.shape_cast %39 : vector<1x1x1x128x128xf32> to vector<128x128xf32>
    %41 = vector.shape_cast %38 : vector<128x128xf32> to vector<1x1x1x128x128xf32>
    tpu.vector_store %arg7[%c0_42, %c0_43, %c6, %c0_44, %c0_45], %41 {strides = array<i32>} : memref<1x1x8x128x128xf32, #tpu.memory_space<vmem>>, vector<1x1x1x128x128xf32>,
    %42 = vector.extract_strided_slice %6 {offsets = [0, 56], sizes = [128, 8], strides = [1, 1]} : vector<128x64xf32> to vector<128x8xf32>
    %cst_46 = arith.constant dense<0.000000e+00> : vector<128x128xf32>
    %43 = tpu.matmul %42, %3, %cst_46 {dimension_numbers = #tpu.dot_dimension_numbers<[1], [1], [0], [0], [0, 0, 1, 0], [], []>} : vector<128x8xf32>, vector<128x8xf32>, vector<128x128xf32> -> vector<128x128xf32>
    %c0_47 = arith.constant 0 : index
    %c0_48 = arith.constant 0 : index
    %c7 = arith.constant 7 : index
    %c0_49 = arith.constant 0 : index
    %c0_50 = arith.constant 0 : index
    %44 = vector.load %arg7[%c0_47, %c0_48, %c7, %c0_49, %c0_50] : memref<1x1x8x128x128xf32, #tpu.memory_space<vmem>>, vector<1x1x1x128x128xf32>
    %45 = vector.shape_cast %44 : vector<1x1x1x128x128xf32> to vector<128x128xf32>
    %46 = vector.shape_cast %43 : vector<128x128xf32> to vector<1x1x1x128x128xf32>
    tpu.vector_store %arg7[%c0_47, %c0_48, %c7, %c0_49, %c0_50], %46 {strides = array<i32>} : memref<1x1x8x128x128xf32, #tpu.memory_space<vmem>>, vector<1x1x1x128x128xf32>,
    return
  }
  func.func @transform_0(%arg0: i32, %arg1: i32, %arg2: i32, %arg3: i32) -> (i32, i32, i32, i32) {
    %c0_i32 = arith.constant 0 : i32
    %c0_i32_0 = arith.constant 0 : i32
    return %arg1, %arg0, %arg2, %c0_i32 : i32, i32, i32, i32
  }
  func.func @transform_1(%arg0: i32, %arg1: i32, %arg2: i32, %arg3: i32) -> (i32, i32, i32, i32) {
    %c0_i32 = arith.constant 0 : i32
    %c0_i32_0 = arith.constant 0 : i32
    return %arg1, %arg0, %arg3, %c0_i32 : i32, i32, i32, i32
  }
  func.func @transform_2(%arg0: i32, %arg1: i32, %arg2: i32, %arg3: i32) -> (i32, i32, i32) {
    %c0_i32 = arith.constant 0 : i32
    %c0_i32_0 = arith.constant 0 : i32
    %c0_i32_1 = arith.constant 0 : i32
    return %arg0, %c0_i32, %c0_i32_0 : i32, i32, i32
  }
  func.func @transform_3(%arg0: i32, %arg1: i32, %arg2: i32, %arg3: i32) -> (i32, i32, i32, i32, i32) {
    %c0_i32 = arith.constant 0 : i32
    %c0_i32_0 = arith.constant 0 : i32
    return %arg1, %arg0, %c0_i32, %arg2, %arg3 : i32, i32, i32, i32, i32
  }
}

</mosaic_0001>

<llo_original>
// kernel: tpu_custom_call.1
$region0: #{tpu_custom_call.1}
  #allocation0 [shape = 'u32[]', space=smem, size = 0x4, offset = 0x4, fixed_abs, tag = 'smem constant byte address 0x4 - core index']
  #allocation1 [shape = 'u32[144,128]{1,0:T(1,128)}', space=vmem, size = 0x12000, scoped, tag = 'internal scratch']
  %s0 = inlined_call_operand.vmem [shape: f32[2,4,128,8], index: 0, kind: input, shape index: {}]
  %s1 = inlined_call_operand.vmem [shape: f32[2,4,128,8], index: 1, kind: input, shape index: {}]
  %s2 = inlined_call_operand.hbm [shape: f32[4,8,64], index: 2, kind: input, shape index: {}]
  %s3 = inlined_call_operand.hbm [shape: f32[2,4,8,128,128], index: 3, kind: output, shape index: {}]
  %s4 = sld [smem:[#allocation0]]
  $region49: #{tpu_custom_call.1} parent=0
    _
  %s6 = ssub.s32 1, %s4
  %s7 = scalar_select 0, %s6, %s4
  $region1: #{tpu_custom_call.1} parent=0
    #allocation2 [shape = 'u8[8192]{0}', space=vmem, size = 0x2000, scoped, tag = 'input window, operand 2']
    #allocation3 [shape = 's32[2]{0}', space=sflag, size = 0x8, scoped, tag = 'scoped memory for tpu_custom_call.1']
    #allocation4 [shape = 's32[2]{0}', space=sflag, size = 0x8, scoped, tag = 'scoped memory for tpu_custom_call.1']
    #allocation5 [shape = 'u8[1048576]{0}', space=vmem, size = 0x100000, scoped, tag = 'output window, operand 0']
    %8 = vsyncpa [#allocation3], 0
    %s9 = scalar_lea.sflag [#allocation3], 1
    %10 = vsyncpa %s9, 0
    %11 = vsyncpa [#allocation4], 0
    %s12 = scalar_lea.sflag [#allocation4], 1
    %13 = vsyncpa %s12, 0
    loop: start=0, step=1, limit=10
    $region2: #{tpu_custom_call.1} parent=1 // loop_pre_header
      _
    $region3: #{tpu_custom_call.1} parent=1 // loop_header
      %s15 = sphi 0, %s19
      %p16 = scmp.ge.s32.totalorder %s15, 10
      %s22 = sphi 0, %s48
      %s23 = sphi 0, %s44
      %s24 = sphi 0, %s40
      %s25 = sphi 0, %s36
      %s26 = sphi 0, %s22
      %s27 = sphi 0, %s23
      %s28 = sphi 0, %s24
      %s29 = sphi 0, %s25
      %s30 = sphi 0, %s26
      %s31 = sphi 0, %s27
      %s32 = sphi 0, %s28
      %s33 = sphi 0, %s29
      %s55 = sphi 0, %s57
      %s58 = sphi 0, %s55
      %s59 = sphi 0, %s58
      %s75 = sphi 0, %s59
      %s85 = sphi 0, %s87
      %s88 = sphi 0, %s85
      %s89 = sphi 0, %s88
      %s105 = sphi 0, %s89
      %s111 = sphi 0, %s113
      %s114 = sphi 0, %s111
      %s115 = sphi 0, %s114
      %s131 = sphi 0, %s115
      %s143 = sphi 0, %s145
      %s146 = sphi 0, %s143
      %s147 = sphi 0, %s146
      %s163 = sphi 0, %s147
    $region4: #{tpu_custom_call.1} parent=1 // loop_header_branch
      %18 = sbr.rel (%p16) target = $region8
    $region5: #{tpu_custom_call.1} parent=1 // loop_body
      %s20 = ssub.s32 %s15, 1
      %s21 = ssub.s32 %s15, 2
      %s34 = sadd.s32 1, %s25
      %p35 = scmp.ge.s32.totalorder %s34, 1
      %s36 = scalar_select %p35, 0, %s34
      %s37 = sadd.s32 1, %s24
      %s38 = scalar_select %p35, %s37, %s24
      %p39 = scmp.ge.s32.totalorder %s38, 1
      %s40 = scalar_select %p39, 0, %s38
      %s41 = sadd.s32 1, %s23
      %s42 = scalar_select %p39, %s41, %s23
      %p43 = scmp.ge.s32.totalorder %s42, 2
      %s44 = scalar_select %p43, 0, %s42
      %s45 = sadd.s32 1, %s22
      %s46 = scalar_select %p43, %s45, %s22
      %p47 = scmp.ge.s32.totalorder %s46, 4
      %s48 = scalar_select %p47, 0, %s46
      %s49 = ssub.s32 %s23, %s44
      %s50 = ssub.s32 %s22, %s48
      %s51 = sor.u32 %s49, %s50
      %s52 = ssub.s32 %s24, %s40
      %s53 = sor.u32 %s51, %s52
      %p54 = scmp.eq.s32.totalorder %s53, 0
      %s56 = sadd.s32 %s55, 1
      %s57 = scalar_select %p54, %s55, %s56
      %p60 = pneg %p54
      %p61 = scmp.eq.s32.totalorder %s15, 7
      %p62 = por %p60, %p61
      %p63 = scmp.ne.s32.totalorder %s55, %s58
      %p64 = scmp.eq.s32.totalorder %s15, 0
      %p65 = por %p63, %p64
      %p66 = scmp.ne.s32.totalorder %s55, %s58
      %p67 = scmp.eq.s32.totalorder %s20, 7
      %p68 = por %p66, %p67
      %p69 = scmp.ne.s32.totalorder %s58, %s59
      %p70 = scmp.eq.s32.totalorder %s20, 0
      %p71 = por %p69, %p70
      %p72 = scmp.ne.s32.totalorder %s58, %s59
      %p73 = scmp.eq.s32.totalorder %s21, 7
      %p74 = por %p72, %p73
      %p76 = scmp.ne.s32.totalorder %s59, %s75
      %p77 = scmp.eq.s32.totalorder %s21, 0
      %p78 = por %p76, %p77
      %s79 = ssub.s32 %s23, %s44
      %s80 = ssub.s32 %s22, %s48
      %s81 = sor.u32 %s79, %s80
      %s82 = ssub.s32 %s25, %s36
      %s83 = sor.u32 %s81, %s82
      %p84 = scmp.eq.s32.totalorder %s83, 0
      %s86 = sadd.s32 %s85, 1
      %s87 = scalar_select %p84, %s85, %s86
      %p90 = pneg %p84
      %p91 = scmp.eq.s32.totalorder %s15, 7
      %p92 = por %p90, %p91
      %p93 = scmp.ne.s32.totalorder %s85, %s88
      %p94 = scmp.eq.s32.totalorder %s15, 0
      %p95 = por %p93, %p94
      %p96 = scmp.ne.s32.totalorder %s85, %s88
      %p97 = scmp.eq.s32.totalorder %s20, 7
      %p98 = por %p96, %p97
      %p99 = scmp.ne.s32.totalorder %s88, %s89
      %p100 = scmp.eq.s32.totalorder %s20, 0
      %p101 = por %p99, %p100
      %p102 = scmp.ne.s32.totalorder %s88, %s89
      %p103 = scmp.eq.s32.totalorder %s21, 7
      %p104 = por %p102, %p103
      %p106 = scmp.ne.s32.totalorder %s89, %s105
      %p107 = scmp.eq.s32.totalorder %s21, 0
      %p108 = por %p106, %p107
      %s109 = ssub.s32 %s22, %s48
      %p110 = scmp.eq.s32.totalorder %s109, 0
      %s112 = sadd.s32 %s111, 1
      %s113 = scalar_select %p110, %s111, %s112
      %p116 = pneg %p110
      %p117 = scmp.eq.s32.totalorder %s15, 7
      %p118 = por %p116, %p117
      %p119 = scmp.ne.s32.totalorder %s111, %s114
      %p120 = scmp.eq.s32.totalorder %s15, 0
      %p121 = por %p119, %p120
      %p122 = scmp.ne.s32.totalorder %s111, %s114
      %p123 = scmp.eq.s32.totalorder %s20, 7
      %p124 = por %p122, %p123
      %p125 = scmp.ne.s32.totalorder %s114, %s115
      %p126 = scmp.eq.s32.totalorder %s20, 0
      %p127 = por %p125, %p126
      %p128 = scmp.ne.s32.totalorder %s114, %s115
      %p129 = scmp.eq.s32.totalorder %s21, 7
      %p130 = por %p128, %p129
      %p132 = scmp.ne.s32.totalorder %s115, %s131
      %p133 = scmp.eq.s32.totalorder %s21, 0
      %p134 = por %p132, %p133
      %s135 = ssub.s32 %s23, %s44
      %s136 = ssub.s32 %s22, %s48
      %s137 = sor.u32 %s135, %s136
      %s138 = ssub.s32 %s24, %s40
      %s139 = sor.u32 %s137, %s138
      %s140 = ssub.s32 %s25, %s36
      %s141 = sor.u32 %s139, %s140
      %p142 = scmp.eq.s32.totalorder %s141, 0
      %s144 = sadd.s32 %s143, 1
      %s145 = scalar_select %p142, %s143, %s144
      %p148 = pneg %p142
      %p149 = scmp.eq.s32.totalorder %s15, 7
      %p150 = por %p148, %p149
      %p151 = scmp.ne.s32.totalorder %s143, %s146
      %p152 = scmp.eq.s32.totalorder %s15, 0
      %p153 = por %p151, %p152
      %p154 = scmp.ne.s32.totalorder %s143, %s146
      %p155 = scmp.eq.s32.totalorder %s20, 7
      %p156 = por %p154, %p155
      %p157 = scmp.ne.s32.totalorder %s146, %s147
      %p158 = scmp.eq.s32.totalorder %s20, 0
      %p159 = por %p157, %p158
      %p160 = scmp.ne.s32.totalorder %s146, %s147
      %p161 = scmp.eq.s32.totalorder %s21, 7
      %p162 = por %p160, %p161
      %p164 = scmp.ne.s32.totalorder %s147, %s163
      %p165 = scmp.eq.s32.totalorder %s21, 0
      %p166 = por %p164, %p165
      %p167 = scmp.le.s32.totalorder 1, %s15
      %p168 = scmp.lt.s32.totalorder %s15, 9
      %p169 = pnand %p167, %p168
      %p170 = pneg %p169
      // Predicated region
      $region9: #{tpu_custom_call.1} parent=5 // pred_check
        _
      $region10: #{tpu_custom_call.1} parent=5 // pred_check_branch
        %172 = sbr.rel (%p169) target = $region12
      $region11: #{tpu_custom_call.1} parent=5 // pred_region
        %s173 = ssub.s32 %s15, 1
      $region12: #{tpu_custom_call.1} parent=5 // pred_fallthru
        _
      %p174 = scmp.lt.s32.totalorder %s15, 8
      // Predicated region
      $region13: #{tpu_custom_call.1} parent=5 // pred_check
        %p175 = pneg %p174
      $region14: #{tpu_custom_call.1} parent=5 // pred_check_branch
        %177 = sbr.rel (%p175) target = $region16
      $region15: #{tpu_custom_call.1} parent=5 // pred_region
        // Predicated region
        $region17: #{tpu_custom_call.1} parent=15 // pred_check
          %p178 = pneg %p65
        $region18: #{tpu_custom_call.1} parent=15 // pred_check_branch
          %180 = sbr.rel (%p178) target = $region20
        $region19: #{tpu_custom_call.1} parent=15 // pred_region
          %s181 = smul.u32 16, %s24
          %p182 = scmp.lt.s32.totalorder %s23, 1
          %s183 = scalar_select %p182, %s23, 1
          %p184 = scmp.lt.s32.totalorder %s22, 3
          %s185 = scalar_select %p184, %s22, 3
          %p186 = scmp.lt.s32.totalorder %s181, 15
          %s187 = scalar_select %p186, %s181, 15
          %s188 = smul.addr %s185, 16
          %s189 = sadd.s32 %s187, %s188
          %s190 = smul.addr %s183, 64
          %s191 = sadd.s32 %s189, %s190
          %s192 = smul.addr %s191, 8
          %s193 = scalar_lea.vmem %s0, %s192
          %s194 = smul.u32 16, %s24
        $region20: #{tpu_custom_call.1} parent=15 // pred_fallthru
          _
        // Predicated region
        $region21: #{tpu_custom_call.1} parent=15 // pred_check
          %p195 = pneg %p95
        $region22: #{tpu_custom_call.1} parent=15 // pred_check_branch
          %197 = sbr.rel (%p195) target = $region24
        $region23: #{tpu_custom_call.1} parent=15 // pred_region
          %s198 = smul.u32 16, %s25
          %p199 = scmp.lt.s32.totalorder %s23, 1
          %s200 = scalar_select %p199, %s23, 1
          %p201 = scmp.lt.s32.totalorder %s22, 3
          %s202 = scalar_select %p201, %s22, 3
          %p203 = scmp.lt.s32.totalorder %s198, 15
          %s204 = scalar_select %p203, %s198, 15
          %s205 = smul.addr %s202, 16
          %s206 = sadd.s32 %s204, %s205
          %s207 = smul.addr %s200, 64
          %s208 = sadd.s32 %s206, %s207
          %s209 = smul.addr %s208, 8
          %s210 = scalar_lea.vmem %s1, %s209
          %s211 = smul.u32 16, %s25
        $region24: #{tpu_custom_call.1} parent=15 // pred_fallthru
          _
        // Predicated region
        $region25: #{tpu_custom_call.1} parent=15 // pred_check
          %p212 = pneg %p121
        $region26: #{tpu_custom_call.1} parent=15 // pred_check_branch
          %214 = sbr.rel (%p212) target = $region28
        $region27: #{tpu_custom_call.1} parent=15 // pred_region
          %s215 = sand.u32 %s111, 1
          %s216 = scalar_lea.sflag [#allocation3], %s215
          %s217 = sand.u32 %s111, 1
          %s218 = smul.addr %s217, 8
          %s219 = scalar_lea.vmem [#allocation2], %s218
          %s221 = ssub.s32 128, 128
          %222 = vsyncadd %s216, %s221
          %s223 = smul.addr %s22, 128
          %s224 = scalar_lea.hbm %s2, %s223
          %s226 = sshll.u32 %s219, 4
          %s227 = int_to_ptr.vmem [resolvable:$true] %s226
          %229 = dma.hbm_to_vmem [thread:$0]  %s224, 128, %s227, %s216
        $region28: #{tpu_custom_call.1} parent=15 // pred_fallthru
          _
      $region16: #{tpu_custom_call.1} parent=5 // pred_fallthru
        _
      %p230 = scmp.le.s32.totalorder 1, %s15
      %p231 = scmp.lt.s32.totalorder %s15, 9
      %p232 = pnand %p230, %p231
      %p233 = pneg %p232
      // Predicated region
      $region29: #{tpu_custom_call.1} parent=5 // pred_check
        _
      $region30: #{tpu_custom_call.1} parent=5 // pred_check_branch
        %235 = sbr.rel (%p232) target = $region32
      $region31: #{tpu_custom_call.1} parent=5 // pred_region
        %s236 = ssub.s32 %s15, 1
        %s237 = sand.u32 %s114, 1
        %s238 = scalar_lea.sflag [#allocation3], %s237
        %s239 = sand.u32 %s114, 1
        %s240 = smul.addr %s239, 8
        %s241 = scalar_lea.vmem [#allocation2], %s240
        // Predicated region
        $region33: #{tpu_custom_call.1} parent=31 // pred_check
          %p242 = pneg %p127
        $region34: #{tpu_custom_call.1} parent=31 // pred_check_branch
          %244 = sbr.rel (%p242) target = $region36
        $region35: #{tpu_custom_call.1} parent=31 // pred_region
          %245 = dma.done %s238, 128
        $region36: #{tpu_custom_call.1} parent=31 // pred_fallthru
          _
        %s246 = smul.u32 16, %s28
        %p247 = scmp.lt.s32.totalorder %s27, 1
        %s248 = scalar_select %p247, %s27, 1
        %p249 = scmp.lt.s32.totalorder %s26, 3
        %s250 = scalar_select %p249, %s26, 3
        %p251 = scmp.lt.s32.totalorder %s246, 15
        %s252 = scalar_select %p251, %s246, 15
        %s253 = smul.addr %s250, 16
        %s254 = sadd.s32 %s252, %s253
        %s255 = smul.addr %s248, 64
        %s256 = sadd.s32 %s254, %s255
        %s257 = smul.addr %s256, 8
        %s258 = scalar_lea.vmem %s0, %s257
        %p259 = pneg %p71
        %p260 = pneg %p68
        %s261 = smul.u32 16, %s29
        %p262 = scmp.lt.s32.totalorder %s27, 1
        %s263 = scalar_select %p262, %s27, 1
        %p264 = scmp.lt.s32.totalorder %s26, 3
        %s265 = scalar_select %p264, %s26, 3
        %p266 = scmp.lt.s32.totalorder %s261, 15
        %s267 = scalar_select %p266, %s261, 15
        %s268 = smul.addr %s265, 16
        %s269 = sadd.s32 %s267, %s268
        %s270 = smul.addr %s263, 64
        %s271 = sadd.s32 %s269, %s270
        %s272 = smul.addr %s271, 8
        %s273 = scalar_lea.vmem %s1, %s272
        %p274 = pneg %p101
        %p275 = pneg %p98
        %s276 = sand.u32 %s114, 1
        %s277 = scalar_lea.sflag [#allocation3], %s276
        %s278 = sand.u32 %s114, 1
        %s279 = smul.addr %s278, 8
        %s280 = scalar_lea.vmem [#allocation2], %s279
        %p281 = pneg %p127
        %p282 = pneg %p124
        %p283 = pneg %p159
        %p284 = pneg %p156
        %s285 = sand.u32 %s146, 1
        %s286 = scalar_lea.sflag [#allocation4], %s285
        %s287 = sand.u32 %s146, 1
        %s288 = smul.addr %s287, 1024
        %s289 = scalar_lea.vmem [#allocation5], %s288
        %s290 = smul.u32 16, %s28
        %p291 = scmp.lt.s32.totalorder %s27, 1
        %s292 = scalar_select %p291, %s27, 1
        %p293 = scmp.lt.s32.totalorder %s26, 3
        %s294 = scalar_select %p293, %s26, 3
        %p295 = scmp.lt.s32.totalorder %s290, 15
        %s296 = scalar_select %p295, %s290, 15
        %s297 = smul.addr %s294, 16
        %s298 = sadd.s32 %s296, %s297
        %s299 = smul.addr %s292, 64
        %s300 = sadd.s32 %s298, %s299
        %s301 = smul.addr %s300, 8
        %s302 = scalar_lea.vmem %s0, %s301
        %s303 = smul.u32 16, %s28
        %s304 = smul.u32 16, %s29
        %p305 = scmp.lt.s32.totalorder %s27, 1
        %s306 = scalar_select %p305, %s27, 1
        %p307 = scmp.lt.s32.totalorder %s26, 3
        %s308 = scalar_select %p307, %s26, 3
        %p309 = scmp.lt.s32.totalorder %s304, 15
        %s310 = scalar_select %p309, %s304, 15
        %s311 = smul.addr %s308, 16
        %s312 = sadd.s32 %s310, %s311
        %s313 = smul.addr %s306, 64
        %s314 = sadd.s32 %s312, %s313
        %s315 = smul.addr %s314, 8
        %s316 = scalar_lea.vmem %s1, %s315
        %s317 = smul.u32 16, %s29
        %s318 = smul.u32 16, %s28
        %v319 = vld [vmem:[%s302] sm:$0xff]
        %v320 = vld [vmem:[%s302 + $0x8] sm:$0xff]
        %v321 = vld [vmem:[%s302 + $0x10] sm:$0xff]
        %v322 = vld [vmem:[%s302 + $0x18] sm:$0xff]
        %v323 = vld [vmem:[%s302 + $0x20] sm:$0xff]
        %v324 = vld [vmem:[%s302 + $0x28] sm:$0xff]
        %v325 = vld [vmem:[%s302 + $0x30] sm:$0xff]
        %v326 = vld [vmem:[%s302 + $0x38] sm:$0xff]
        %v327 = vld [vmem:[%s302 + $0x40] sm:$0xff]
        %v328 = vld [vmem:[%s302 + $0x48] sm:$0xff]
        %v329 = vld [vmem:[%s302 + $0x50] sm:$0xff]
        %v330 = vld [vmem:[%s302 + $0x58] sm:$0xff]
        %v331 = vld [vmem:[%s302 + $0x60] sm:$0xff]
        %v332 = vld [vmem:[%s302 + $0x68] sm:$0xff]
        %v333 = vld [vmem:[%s302 + $0x70] sm:$0xff]
        %v334 = vld [vmem:[%s302 + $0x78] sm:$0xff]
        %v335 = vld [vmem:[%s316] sm:$0xff]
        %v336 = vld [vmem:[%s316 + $0x8] sm:$0xff]
        %v337 = vld [vmem:[%s316 + $0x10] sm:$0xff]
        %v338 = vld [vmem:[%s316 + $0x18] sm:$0xff]
        %v339 = vld [vmem:[%s316 + $0x20] sm:$0xff]
        %v340 = vld [vmem:[%s316 + $0x28] sm:$0xff]
        %v341 = vld [vmem:[%s316 + $0x30] sm:$0xff]
        %v342 = vld [vmem:[%s316 + $0x38] sm:$0xff]
        %v343 = vld [vmem:[%s316 + $0x40] sm:$0xff]
        %v344 = vld [vmem:[%s316 + $0x48] sm:$0xff]
        %v345 = vld [vmem:[%s316 + $0x50] sm:$0xff]
        %v346 = vld [vmem:[%s316 + $0x58] sm:$0xff]
        %v347 = vld [vmem:[%s316 + $0x60] sm:$0xff]
        %v348 = vld [vmem:[%s316 + $0x68] sm:$0xff]
        %v349 = vld [vmem:[%s316 + $0x70] sm:$0xff]
        %v350 = vld [vmem:[%s316 + $0x78] sm:$0xff]
        %v351 = vld [vmem:[%s241] sm:$0xff]
        %vm352 = vcmask 64512
        %v354 = vsel %vm352, %v319, 0
        %v357 = vsel %vm352, %v320, 0
        %v360 = vsel %vm352, %v321, 0
        %v363 = vsel %vm352, %v322, 0
        %v366 = vsel %vm352, %v323, 0
        %v369 = vsel %vm352, %v324, 0
        %v372 = vsel %vm352, %v325, 0
        %v375 = vsel %vm352, %v326, 0
        %v378 = vsel %vm352, %v327, 0
        %v381 = vsel %vm352, %v328, 0
        %v384 = vsel %vm352, %v329, 0
        %v387 = vsel %vm352, %v330, 0
        %v390 = vsel %vm352, %v331, 0
        %v393 = vsel %vm352, %v332, 0
        %v396 = vsel %vm352, %v333, 0
        %v399 = vsel %vm352, %v334, 0
        %401 = vmatprep.subr.mxu0 0.0
        %402 = vmatpush1.msra.mxu0 %v351
        %403 = vmatprep.subr.mxu0 0.0
        %404 = vmatpush1.msra.mxu0 0.0
        %405 = vmatprep.subr.mxu0 0.0
        %406 = vmatpush1.msra.mxu0 0.0
        %407 = vmatprep.subr.mxu0 0.0
        %408 = vmatpush1.msra.mxu0 0.0
        %409 = vmatprep.subr.mxu0 0.0
        %410 = vmatpush1.msra.mxu0 0.0
        %411 = vmatprep.subr.mxu0 0.0
        %412 = vmatpush1.msra.mxu0 0.0
        %413 = vmatprep.subr.mxu0 0.0
        %414 = vmatpush1.msra.mxu0 0.0
        %415 = vmatprep.subr.mxu0 0.0
        %416 = vmatpush1.msra.mxu0 0.0
        %417 = vmatprep.subr.mxu0 0.0
        %418 = vmatpush1.msra.mxu0 0.0
        %419 = vmatprep.subr.mxu0 0.0
        %420 = vmatpush1.msra.mxu0 0.0
        %421 = vmatprep.subr.mxu0 0.0
        %422 = vmatpush1.msra.mxu0 0.0
        %423 = vmatprep.subr.mxu0 0.0
        %424 = vmatpush1.msra.mxu0 0.0
        %425 = vmatprep.subr.mxu0 0.0
        %426 = vmatpush1.msra.mxu0 0.0
        %427 = vmatprep.subr.mxu0 0.0
        %428 = vmatpush1.msra.mxu0 0.0
        %429 = vmatprep.subr.mxu0 0.0
        %430 = vmatpush1.msra.mxu0 0.0
        %431 = vmatprep.subr.mxu0 0.0
        %432 = vmatpush1.msra.mxu0 0.0
        %433 = vmatprep.subr.mxu0 0.0
        %434 = vmatpush1.msra.mxu0 0.0
        %435 = vmatprep.subr.mxu0 0.0
        %436 = vmatpush1.msra.mxu0 0.0
        %437 = vmatprep.subr.mxu0 0.0
        %438 = vmatpush1.msra.mxu0 0.0
        %439 = vmatprep.subr.mxu0 0.0
        %440 = vmatpush1.msra.mxu0 0.0
        %441 = vmatprep.subr.mxu0 0.0
        %442 = vmatpush1.msra.mxu0 0.0
        %443 = vmatprep.subr.mxu0 0.0
        %444 = vmatpush1.msra.mxu0 0.0
        %445 = vmatprep.subr.mxu0 0.0
        %446 = vmatpush1.msra.mxu0 0.0
        %447 = vmatprep.subr.mxu0 0.0
        %448 = vmatpush1.msra.mxu0 0.0
        %449 = vmatprep.subr.mxu0 0.0
        %450 = vmatpush1.msra.mxu0 0.0
        %451 = vmatprep.subr.mxu0 0.0
        %452 = vmatpush1.msra.mxu0 0.0
        %453 = vmatprep.subr.mxu0 0.0
        %454 = vmatpush1.msra.mxu0 0.0
        %455 = vmatprep.subr.mxu0 0.0
        %456 = vmatpush1.msra.mxu0 0.0
        %457 = vmatprep.subr.mxu0 0.0
        %458 = vmatpush1.msra.mxu0 0.0
        %459 = vmatprep.subr.mxu0 0.0
        %460 = vmatpush1.msra.mxu0 0.0
        %461 = vmatprep.subr.mxu0 0.0
        %462 = vmatpush1.msra.mxu0 0.0
        %463 = vmatprep.subr.mxu0 0.0
        %464 = vmatpush1.msra.mxu0 0.0
        %465 = vmatprep.mubr.f32.mxu0 0.0
        %466 = vmatmul.mubr.f32.gmra.mrb[0].mxu0 %v354
        %v467 = vpop.f32.mrb[0].mxu0
        %v468 = vadd.f32 0.0, %v467
        %v469 = vpop.f32.mrb[0].mxu0
        %470 = vmatprep.mubr.f32.mxu0 0.0
        %471 = vmatmul.mubr.f32.gmra.mrb[0].mxu0 %v357
        %v472 = vpop.f32.mrb[0].mxu0
        %v473 = vadd.f32 0.0, %v472
        %v474 = vpop.f32.mrb[0].mxu0
        %475 = vmatprep.mubr.f32.mxu0 0.0
        %476 = vmatmul.mubr.f32.gmra.mrb[0].mxu0 %v360
        %v477 = vpop.f32.mrb[0].mxu0
        %v478 = vadd.f32 0.0, %v477
        %v479 = vpop.f32.mrb[0].mxu0
        %480 = vmatprep.mubr.f32.mxu0 0.0
        %481 = vmatmul.mubr.f32.gmra.mrb[0].mxu0 %v363
        %v482 = vpop.f32.mrb[0].mxu0
        %v483 = vadd.f32 0.0, %v482
        %v484 = vpop.f32.mrb[0].mxu0
        %485 = vmatprep.mubr.f32.mxu0 0.0
        %486 = vmatmul.mubr.f32.gmra.mrb[0].mxu0 %v366
        %v487 = vpop.f32.mrb[0].mxu0
        %v488 = vadd.f32 0.0, %v487
        %v489 = vpop.f32.mrb[0].mxu0
        %490 = vmatprep.mubr.f32.mxu0 0.0
        %491 = vmatmul.mubr.f32.gmra.mrb[0].mxu0 %v369
        %v492 = vpop.f32.mrb[0].mxu0
        %v493 = vadd.f32 0.0, %v492
        %v494 = vpop.f32.mrb[0].mxu0
        %495 = vmatprep.mubr.f32.mxu0 0.0
        %496 = vmatmul.mubr.f32.gmra.mrb[0].mxu0 %v372
        %v497 = vpop.f32.mrb[0].mxu0
        %v498 = vadd.f32 0.0, %v497
        %v499 = vpop.f32.mrb[0].mxu0
        %500 = vmatprep.mubr.f32.mxu0 0.0
        %501 = vmatmul.mubr.f32.gmra.mrb[0].mxu0 %v375
        %v502 = vpop.f32.mrb[0].mxu0
        %v503 = vadd.f32 0.0, %v502
        %v504 = vpop.f32.mrb[0].mxu0
        %505 = vmatprep.mubr.f32.mxu0 0.0
        %506 = vmatmul.mubr.f32.gmra.mrb[0].mxu0 %v378
        %v507 = vpop.f32.mrb[0].mxu0
        %v508 = vadd.f32 0.0, %v507
        %v509 = vpop.f32.mrb[0].mxu0
        %510 = vmatprep.mubr.f32.mxu0 0.0
        %511 = vmatmul.mubr.f32.gmra.mrb[0].mxu0 %v381
        %v512 = vpop.f32.mrb[0].mxu0
        %v513 = vadd.f32 0.0, %v512
        %v514 = vpop.f32.mrb[0].mxu0
        %515 = vmatprep.mubr.f32.mxu0 0.0
        %516 = vmatmul.mubr.f32.gmra.mrb[0].mxu0 %v384
        %v517 = vpop.f32.mrb[0].mxu0
        %v518 = vadd.f32 0.0, %v517
        %v519 = vpop.f32.mrb[0].mxu0
        %520 = vmatprep.mubr.f32.mxu0 0.0
        %521 = vmatmul.mubr.f32.gmra.mrb[0].mxu0 %v387
        %v522 = vpop.f32.mrb[0].mxu0
        %v523 = vadd.f32 0.0, %v522
        %v524 = vpop.f32.mrb[0].mxu0
        %525 = vmatprep.mubr.f32.mxu0 0.0
        %526 = vmatmul.mubr.f32.gmra.mrb[0].mxu0 %v390
        %v527 = vpop.f32.mrb[0].mxu0
        %v528 = vadd.f32 0.0, %v527
        %v529 = vpop.f32.mrb[0].mxu0
        %530 = vmatprep.mubr.f32.mxu0 0.0
        %531 = vmatmul.mubr.f32.gmra.mrb[0].mxu0 %v393
        %v532 = vpop.f32.mrb[0].mxu0
        %v533 = vadd.f32 0.0, %v532
        %v534 = vpop.f32.mrb[0].mxu0
        %535 = vmatprep.mubr.f32.mxu0 0.0
        %536 = vmatmul.mubr.f32.gmra.mrb[0].mxu0 %v396
        %v537 = vpop.f32.mrb[0].mxu0
        %v538 = vadd.f32 0.0, %v537
        %v539 = vpop.f32.mrb[0].mxu0
        %540 = vmatprep.mubr.f32.mxu0 0.0
        %541 = vmatmul.mubr.f32.gmra.mrb[0].mxu0 %v399
        %v542 = vpop.f32.mrb[0].mxu0
        %v543 = vadd.f32 0.0, %v542
        %v544 = vpop.f32.mrb[0].mxu0
        %545 = vdwg.mxu0
        %v547 = vsel %vm352, %v468, 0
        %v550 = vsel %vm352, %v473, 0
        %v553 = vsel %vm352, %v478, 0
        %v556 = vsel %vm352, %v483, 0
        %v559 = vsel %vm352, %v488, 0
        %v562 = vsel %vm352, %v493, 0
        %v565 = vsel %vm352, %v498, 0
        %v568 = vsel %vm352, %v503, 0
        %v571 = vsel %vm352, %v508, 0
        %v574 = vsel %vm352, %v513, 0
        %v577 = vsel %vm352, %v518, 0
        %v580 = vsel %vm352, %v523, 0
        %v583 = vsel %vm352, %v528, 0
        %v586 = vsel %vm352, %v533, 0
        %v589 = vsel %vm352, %v538, 0
        %v592 = vsel %vm352, %v543, 0
        %v595 = vsel %vm352, %v335, 0
        %v598 = vsel %vm352, %v336, 0
        %v601 = vsel %vm352, %v337, 0
        %v604 = vsel %vm352, %v338, 0
        %v607 = vsel %vm352, %v339, 0
        %v610 = vsel %vm352, %v340, 0
        %v613 = vsel %vm352, %v341, 0
        %v616 = vsel %vm352, %v342, 0
        %v619 = vsel %vm352, %v343, 0
        %v622 = vsel %vm352, %v344, 0
        %v625 = vsel %vm352, %v345, 0
        %v628 = vsel %vm352, %v346, 0
        %v631 = vsel %vm352, %v347, 0
        %v634 = vsel %vm352, %v348, 0
        %v637 = vsel %vm352, %v349, 0
        %v640 = vsel %vm352, %v350, 0
        %642 = vmatprep.subr.mxu0 0.0
        %643 = vmatpush1.xpose.msra.mxu0 %v595
        %644 = vmatprep.subr.mxu0 0.0
        %645 = vmatpush1.xpose.msra.mxu0 %v598
        %646 = vmatprep.subr.mxu0 0.0
        %647 = vmatpush1.xpose.msra.mxu0 %v601
        %648 = vmatprep.subr.mxu0 0.0
        %649 = vmatpush1.xpose.msra.mxu0 %v604
        %650 = vmatprep.subr.mxu0 0.0
        %651 = vmatpush1.xpose.msra.mxu0 %v607
        %652 = vmatprep.subr.mxu0 0.0
        %653 = vmatpush1.xpose.msra.mxu0 %v610
        %654 = vmatprep.subr.mxu0 0.0
        %655 = vmatpush1.xpose.msra.mxu0 %v613
        %656 = vmatprep.subr.mxu0 0.0
        %657 = vmatpush1.xpose.msra.mxu0 %v616
        %658 = vmatprep.subr.mxu0 0.0
        %659 = vmatpush1.xpose.msra.mxu0 %v619
        %660 = vmatprep.subr.mxu0 0.0
        %661 = vmatpush1.xpose.msra.mxu0 %v622
        %662 = vmatprep.subr.mxu0 0.0
        %663 = vmatpush1.xpose.msra.mxu0 %v625
        %664 = vmatprep.subr.mxu0 0.0
        %665 = vmatpush1.xpose.msra.mxu0 %v628
        %666 = vmatprep.subr.mxu0 0.0
        %667 = vmatpush1.xpose.msra.mxu0 %v631
        %668 = vmatprep.subr.mxu0 0.0
        %669 = vmatpush1.xpose.msra.mxu0 %v634
        %670 = vmatprep.subr.mxu0 0.0
        %671 = vmatpush1.xpose.msra.mxu0 %v637
        %672 = vmatprep.subr.mxu0 0.0
        %673 = vmatpush1.xpose.msra.mxu0 %v640
        %674 = vmatprep.subr.mxu0 0.0
        %675 = vmatpush1.xpose.msra.mxu0 0.0
        %676 = vmatprep.subr.mxu0 0.0
        %677 = vmatpush1.xpose.msra.mxu0 0.0
        %678 = vmatprep.subr.mxu0 0.0
        %679 = vmatpush1.xpose.msra.mxu0 0.0
        %680 = vmatprep.subr.mxu0 0.0
        %681 = vmatpush1.xpose.msra.mxu0 0.0
        %682 = vmatprep.subr.mxu0 0.0
        %683 = vmatpush1.xpose.msra.mxu0 0.0
        %684 = vmatprep.subr.mxu0 0.0
        %685 = vmatpush1.xpose.msra.mxu0 0.0
        %686 = vmatprep.subr.mxu0 0.0
        %687 = vmatpush1.xpose.msra.mxu0 0.0
        %688 = vmatprep.subr.mxu0 0.0
        %689 = vmatpush1.xpose.msra.mxu0 0.0
        %690 = vmatprep.subr.mxu0 0.0
        %691 = vmatpush1.xpose.msra.mxu0 0.0
        %692 = vmatprep.subr.mxu0 0.0
        %693 = vmatpush1.xpose.msra.mxu0 0.0
        %694 = vmatprep.subr.mxu0 0.0
        %695 = vmatpush1.xpose.msra.mxu0 0.0
        %696 = vmatprep.subr.mxu0 0.0
        %697 = vmatpush1.xpose.msra.mxu0 0.0
        %698 = vmatprep.subr.mxu0 0.0
        %699 = vmatpush1.xpose.msra.mxu0 0.0
        %700 = vmatprep.subr.mxu0 0.0
        %701 = vmatpush1.xpose.msra.mxu0 0.0
        %702 = vmatprep.subr.mxu0 0.0
        %703 = vmatpush1.xpose.msra.mxu0 0.0
        %704 = vmatprep.subr.mxu0 0.0
        %705 = vmatpush1.xpose.msra.mxu0 0.0
        %706 = vmatprep.mubr.f32.mxu0 0.0
        %707 = vmatmul.mubr.f32.gmra.mrb[0].mxu0 %v547
        %v708 = vpop.f32.mrb[0].mxu0
        %v709 = vadd.f32 0.0, %v708
        %v710 = vpop.f32.mrb[0].mxu0
        %711 = vmatprep.mubr.f32.mxu0 0.0
        %712 = vmatmul.mubr.f32.gmra.mrb[0].mxu0 %v550
        %v713 = vpop.f32.mrb[0].mxu0
        %v714 = vadd.f32 0.0, %v713
        %v715 = vpop.f32.mrb[0].mxu0
        %716 = vmatprep.mubr.f32.mxu0 0.0
        %717 = vmatmul.mubr.f32.gmra.mrb[0].mxu0 %v553
        %v718 = vpop.f32.mrb[0].mxu0
        %v719 = vadd.f32 0.0, %v718
        %v720 = vpop.f32.mrb[0].mxu0
        %721 = vmatprep.mubr.f32.mxu0 0.0
        %722 = vmatmul.mubr.f32.gmra.mrb[0].mxu0 %v556
        %v723 = vpop.f32.mrb[0].mxu0
        %v724 = vadd.f32 0.0, %v723
        %v725 = vpop.f32.mrb[0].mxu0
        %726 = vmatprep.mubr.f32.mxu0 0.0
        %727 = vmatmul.mubr.f32.gmra.mrb[0].mxu0 %v559
        %v728 = vpop.f32.mrb[0].mxu0
        %v729 = vadd.f32 0.0, %v728
        %v730 = vpop.f32.mrb[0].mxu0
        %731 = vmatprep.mubr.f32.mxu0 0.0
        %732 = vmatmul.mubr.f32.gmra.mrb[0].mxu0 %v562
        %v733 = vpop.f32.mrb[0].mxu0
        %v734 = vadd.f32 0.0, %v733
        %v735 = vpop.f32.mrb[0].mxu0
        %736 = vmatprep.mubr.f32.mxu0 0.0
        %737 = vmatmul.mubr.f32.gmra.mrb[0].mxu0 %v565
        %v738 = vpop.f32.mrb[0].mxu0
        %v739 = vadd.f32 0.0, %v738
        %v740 = vpop.f32.mrb[0].mxu0
        %741 = vmatprep.mubr.f32.mxu0 0.0
        %742 = vmatmul.mubr.f32.gmra.mrb[0].mxu0 %v568
        %v743 = vpop.f32.mrb[0].mxu0
        %v744 = vadd.f32 0.0, %v743
        %v745 = vpop.f32.mrb[0].mxu0
        %746 = vmatprep.mubr.f32.mxu0 0.0
        %747 = vmatmul.mubr.f32.gmra.mrb[0].mxu0 %v571
        %v748 = vpop.f32.mrb[0].mxu0
        %v749 = vadd.f32 0.0, %v748
        %v750 = vpop.f32.mrb[0].mxu0
        %751 = vmatprep.mubr.f32.mxu0 0.0
        %752 = vmatmul.mubr.f32.gmra.mrb[0].mxu0 %v574
        %v753 = vpop.f32.mrb[0].mxu0
        %v754 = vadd.f32 0.0, %v753
        %v755 = vpop.f32.mrb[0].mxu0
        %756 = vmatprep.mubr.f32.mxu0 0.0
        %757 = vmatmul.mubr.f32.gmra.mrb[0].mxu0 %v577
        %v758 = vpop.f32.mrb[0].mxu0
        %v759 = vadd.f32 0.0, %v758
        %v760 = vpop.f32.mrb[0].mxu0
        %761 = vmatprep.mubr.f32.mxu0 0.0
        %762 = vmatmul.mubr.f32.gmra.mrb[0].mxu0 %v580
        %v763 = vpop.f32.mrb[0].mxu0
        %v764 = vadd.f32 0.0, %v763
        %v765 = vpop.f32.mrb[0].mxu0
        %766 = vmatprep.mubr.f32.mxu0 0.0
        %767 = vmatmul.mubr.f32.gmra.mrb[0].mxu0 %v583
        %v768 = vpop.f32.mrb[0].mxu0
        %v769 = vadd.f32 0.0, %v768
        %v770 = vpop.f32.mrb[0].mxu0
        %771 = vmatprep.mubr.f32.mxu0 0.0
        %772 = vmatmul.mubr.f32.gmra.mrb[0].mxu0 %v586
        %v773 = vpop.f32.mrb[0].mxu0
        %v774 = vadd.f32 0.0, %v773
        %v775 = vpop.f32.mrb[0].mxu0
        %776 = vmatprep.mubr.f32.mxu0 0.0
        %777 = vmatmul.mubr.f32.gmra.mrb[0].mxu0 %v589
        %v778 = vpop.f32.mrb[0].mxu0
        %v779 = vadd.f32 0.0, %v778
        %v780 = vpop.f32.mrb[0].mxu0
        %781 = vmatprep.mubr.f32.mxu0 0.0
        %782 = vmatmul.mubr.f32.gmra.mrb[0].mxu0 %v592
        %v783 = vpop.f32.mrb[0].mxu0
        %v784 = vadd.f32 0.0, %v783
        %v785 = vpop.f32.mrb[0].mxu0
        %786 = vdwg.mxu0
        %787 = vst [vmem:[%s289] sm:$0xff] %v709
        %788 = vst [vmem:[%s289 + $0x8] sm:$0xff] %v714
        %789 = vst [vmem:[%s289 + $0x10] sm:$0xff] %v719
        %790 = vst [vmem:[%s289 + $0x18] sm:$0xff] %v724
        %791 = vst [vmem:[%s289 + $0x20] sm:$0xff] %v729
        %792 = vst [vmem:[%s289 + $0x28] sm:$0xff] %v734
        %793 = vst [vmem:[%s289 + $0x30] sm:$0xff] %v739
        %794 = vst [vmem:[%s289 + $0x38] sm:$0xff] %v744
        %795 = vst [vmem:[%s289 + $0x40] sm:$0xff] %v749
        %796 = vst [vmem:[%s289 + $0x48] sm:$0xff] %v754
        %797 = vst [vmem:[%s289 + $0x50] sm:$0xff] %v759
        %798 = vst [vmem:[%s289 + $0x58] sm:$0xff] %v764
        %799 = vst [vmem:[%s289 + $0x60] sm:$0xff] %v769
        %800 = vst [vmem:[%s289 + $0x68] sm:$0xff] %v774
        %801 = vst [vmem:[%s289 + $0x70] sm:$0xff] %v779
        %802 = vst [vmem:[%s289 + $0x78] sm:$0xff] %v784
        %803 = vrot.lane.b32.xlu0 %v468, 120
        %v804 = vpop.permute.xlu0 %803
        %805 = vrot.lane.b32.xlu0 %v473, 120
        %v806 = vpop.permute.xlu0 %805
        %807 = vrot.lane.b32.xlu0 %v478, 120
        %v808 = vpop.permute.xlu0 %807
        %809 = vrot.lane.b32.xlu0 %v483, 120
        %v810 = vpop.permute.xlu0 %809
        %811 = vrot.lane.b32.xlu0 %v488, 120
        %v812 = vpop.permute.xlu0 %811
        %813 = vrot.lane.b32.xlu0 %v493, 120
        %v814 = vpop.permute.xlu0 %813
        %815 = vrot.lane.b32.xlu0 %v498, 120
        %v816 = vpop.permute.xlu0 %815
        %817 = vrot.lane.b32.xlu0 %v503, 120
        %v818 = vpop.permute.xlu0 %817
        %819 = vrot.lane.b32.xlu0 %v508, 120
        %v820 = vpop.permute.xlu0 %819
        %821 = vrot.lane.b32.xlu0 %v513, 120
        %v822 = vpop.permute.xlu0 %821
        %823 = vrot.lane.b32.xlu0 %v518, 120
        %v824 = vpop.permute.xlu0 %823
        %825 = vrot.lane.b32.xlu0 %v523, 120
        %v826 = vpop.permute.xlu0 %825
        %827 = vrot.lane.b32.xlu0 %v528, 120
        %v828 = vpop.permute.xlu0 %827
        %829 = vrot.lane.b32.xlu0 %v533, 120
        %v830 = vpop.permute.xlu0 %829
        %831 = vrot.lane.b32.xlu0 %v538, 120
        %v832 = vpop.permute.xlu0 %831
        %833 = vrot.lane.b32.xlu0 %v543, 120
        %v834 = vpop.permute.xlu0 %833
        %v835 = vsel %vm352, %v804, 0
        %v837 = vsel %vm352, %v806, 0
        %v839 = vsel %vm352, %v808, 0
        %v841 = vsel %vm352, %v810, 0
        %v843 = vsel %vm352, %v812, 0
        %v845 = vsel %vm352, %v814, 0
        %v847 = vsel %vm352, %v816, 0
        %v849 = vsel %vm352, %v818, 0
        %v851 = vsel %vm352, %v820, 0
        %v853 = vsel %vm352, %v822, 0
        %v855 = vsel %vm352, %v824, 0
        %v857 = vsel %vm352, %v826, 0
        %v859 = vsel %vm352, %v828, 0
        %v861 = vsel %vm352, %v830, 0
        %v863 = vsel %vm352, %v832, 0
        %v865 = vsel %vm352, %v834, 0
        %867 = vmatprep.subr.mxu0 0.0
        %868 = vmatpush1.xpose.msra.mxu0 %v595
        %869 = vmatprep.subr.mxu0 0.0
        %870 = vmatpush1.xpose.msra.mxu0 %v598
        %871 = vmatprep.subr.mxu0 0.0
        %872 = vmatpush1.xpose.msra.mxu0 %v601
        %873 = vmatprep.subr.mxu0 0.0
        %874 = vmatpush1.xpose.msra.mxu0 %v604
        %875 = vmatprep.subr.mxu0 0.0
        %876 = vmatpush1.xpose.msra.mxu0 %v607
        %877 = vmatprep.subr.mxu0 0.0
        %878 = vmatpush1.xpose.msra.mxu0 %v610
        %879 = vmatprep.subr.mxu0 0.0
        %880 = vmatpush1.xpose.msra.mxu0 %v613
        %881 = vmatprep.subr.mxu0 0.0
        %882 = vmatpush1.xpose.msra.mxu0 %v616
        %883 = vmatprep.subr.mxu0 0.0
        %884 = vmatpush1.xpose.msra.mxu0 %v619
        %885 = vmatprep.subr.mxu0 0.0
        %886 = vmatpush1.xpose.msra.mxu0 %v622
        %887 = vmatprep.subr.mxu0 0.0
        %888 = vmatpush1.xpose.msra.mxu0 %v625
        %889 = vmatprep.subr.mxu0 0.0
        %890 = vmatpush1.xpose.msra.mxu0 %v628
        %891 = vmatprep.subr.mxu0 0.0
        %892 = vmatpush1.xpose.msra.mxu0 %v631
        %893 = vmatprep.subr.mxu0 0.0
        %894 = vmatpush1.xpose.msra.mxu0 %v634
        %895 = vmatprep.subr.mxu0 0.0
        %896 = vmatpush1.xpose.msra.mxu0 %v637
        %897 = vmatprep.subr.mxu0 0.0
        %898 = vmatpush1.xpose.msra.mxu0 %v640
        %899 = vmatprep.subr.mxu0 0.0
        %900 = vmatpush1.xpose.msra.mxu0 0.0
        %901 = vmatprep.subr.mxu0 0.0
        %902 = vmatpush1.xpose.msra.mxu0 0.0
        %903 = vmatprep.subr.mxu0 0.0
        %904 = vmatpush1.xpose.msra.mxu0 0.0
        %905 = vmatprep.subr.mxu0 0.0
        %906 = vmatpush1.xpose.msra.mxu0 0.0
        %907 = vmatprep.subr.mxu0 0.0
        %908 = vmatpush1.xpose.msra.mxu0 0.0
        %909 = vmatprep.subr.mxu0 0.0
        %910 = vmatpush1.xpose.msra.mxu0 0.0
        %911 = vmatprep.subr.mxu0 0.0
        %912 = vmatpush1.xpose.msra.mxu0 0.0
        %913 = vmatprep.subr.mxu0 0.0
        %914 = vmatpush1.xpose.msra.mxu0 0.0
        %915 = vmatprep.subr.mxu0 0.0
        %916 = vmatpush1.xpose.msra.mxu0 0.0
        %917 = vmatprep.subr.mxu0 0.0
        %918 = vmatpush1.xpose.msra.mxu0 0.0
        %919 = vmatprep.subr.mxu0 0.0
        %920 = vmatpush1.xpose.msra.mxu0 0.0
        %921 = vmatprep.subr.mxu0 0.0
        %922 = vmatpush1.xpose.msra.mxu0 0.0
        %923 = vmatprep.subr.mxu0 0.0
        %924 = vmatpush1.xpose.msra.mxu0 0.0
        %925 = vmatprep.subr.mxu0 0.0
        %926 = vmatpush1.xpose.msra.mxu0 0.0
        %927 = vmatprep.subr.mxu0 0.0
        %928 = vmatpush1.xpose.msra.mxu0 0.0
        %929 = vmatprep.subr.mxu0 0.0
        %930 = vmatpush1.xpose.msra.mxu0 0.0
        %931 = vmatprep.mubr.f32.mxu0 0.0
        %932 = vmatmul.mubr.f32.gmra.mrb[0].mxu0 %v835
        %v933 = vpop.f32.mrb[0].mxu0
        %v934 = vadd.f32 0.0, %v933
        %v935 = vpop.f32.mrb[0].mxu0
        %936 = vmatprep.mubr.f32.mxu0 0.0
        %937 = vmatmul.mubr.f32.gmra.mrb[0].mxu0 %v837
        %v938 = vpop.f32.mrb[0].mxu0
        %v939 = vadd.f32 0.0, %v938
        %v940 = vpop.f32.mrb[0].mxu0
        %941 = vmatprep.mubr.f32.mxu0 0.0
        %942 = vmatmul.mubr.f32.gmra.mrb[0].mxu0 %v839
        %v943 = vpop.f32.mrb[0].mxu0
        %v944 = vadd.f32 0.0, %v943
        %v945 = vpop.f32.mrb[0].mxu0
        %946 = vmatprep.mubr.f32.mxu0 0.0
        %947 = vmatmul.mubr.f32.gmra.mrb[0].mxu0 %v841
        %v948 = vpop.f32.mrb[0].mxu0
        %v949 = vadd.f32 0.0, %v948
        %v950 = vpop.f32.mrb[0].mxu0
        %951 = vmatprep.mubr.f32.mxu0 0.0
        %952 = vmatmul.mubr.f32.gmra.mrb[0].mxu0 %v843
        %v953 = vpop.f32.mrb[0].mxu0
        %v954 = vadd.f32 0.0, %v953
        %v955 = vpop.f32.mrb[0].mxu0
        %956 = vmatprep.mubr.f32.mxu0 0.0
        %957 = vmatmul.mubr.f32.gmra.mrb[0].mxu0 %v845
        %v958 = vpop.f32.mrb[0].mxu0
        %v959 = vadd.f32 0.0, %v958
        %v960 = vpop.f32.mrb[0].mxu0
        %961 = vmatprep.mubr.f32.mxu0 0.0
        %962 = vmatmul.mubr.f32.gmra.mrb[0].mxu0 %v847
        %v963 = vpop.f32.mrb[0].mxu0
        %v964 = vadd.f32 0.0, %v963
        %v965 = vpop.f32.mrb[0].mxu0
        %966 = vmatprep.mubr.f32.mxu0 0.0
        %967 = vmatmul.mubr.f32.gmra.mrb[0].mxu0 %v849
        %v968 = vpop.f32.mrb[0].mxu0
        %v969 = vadd.f32 0.0, %v968
        %v970 = vpop.f32.mrb[0].mxu0
        %971 = vmatprep.mubr.f32.mxu0 0.0
        %972 = vmatmul.mubr.f32.gmra.mrb[0].mxu0 %v851
        %v973 = vpop.f32.mrb[0].mxu0
        %v974 = vadd.f32 0.0, %v973
        %v975 = vpop.f32.mrb[0].mxu0
        %976 = vmatprep.mubr.f32.mxu0 0.0
        %977 = vmatmul.mubr.f32.gmra.mrb[0].mxu0 %v853
        %v978 = vpop.f32.mrb[0].mxu0
        %v979 = vadd.f32 0.0, %v978
        %v980 = vpop.f32.mrb[0].mxu0
        %981 = vmatprep.mubr.f32.mxu0 0.0
        %982 = vmatmul.mubr.f32.gmra.mrb[0].mxu0 %v855
        %v983 = vpop.f32.mrb[0].mxu0
        %v984 = vadd.f32 0.0, %v983
        %v985 = vpop.f32.mrb[0].mxu0
        %986 = vmatprep.mubr.f32.mxu0 0.0
        %987 = vmatmul.mubr.f32.gmra.mrb[0].mxu0 %v857
        %v988 = vpop.f32.mrb[0].mxu0
        %v989 = vadd.f32 0.0, %v988
        %v990 = vpop.f32.mrb[0].mxu0
        %991 = vmatprep.mubr.f32.mxu0 0.0
        %992 = vmatmul.mubr.f32.gmra.mrb[0].mxu0 %v859
        %v993 = vpop.f32.mrb[0].mxu0
        %v994 = vadd.f32 0.0, %v993
        %v995 = vpop.f32.mrb[0].mxu0
        %996 = vmatprep.mubr.f32.mxu0 0.0
        %997 = vmatmul.mubr.f32.gmra.mrb[0].mxu0 %v861
        %v998 = vpop.f32.mrb[0].mxu0
        %v999 = vadd.f32 0.0, %v998
        %v1000 = vpop.f32.mrb[0].mxu0
        %1001 = vmatprep.mubr.f32.mxu0 0.0
        %1002 = vmatmul.mubr.f32.gmra.mrb[0].mxu0 %v863
        %v1003 = vpop.f32.mrb[0].mxu0
        %v1004 = vadd.f32 0.0, %v1003
        %v1005 = vpop.f32.mrb[0].mxu0
        %1006 = vmatprep.mubr.f32.mxu0 0.0
        %1007 = vmatmul.mubr.f32.gmra.mrb[0].mxu0 %v865
        %v1008 = vpop.f32.mrb[0].mxu0
        %v1009 = vadd.f32 0.0, %v1008
        %v1010 = vpop.f32.mrb[0].mxu0
        %1011 = vdwg.mxu0
        %s1012 = scalar_lea.vmem %s289, 128 [#allocation5]
        %1013 = vst [vmem:[%s1012] sm:$0xff] %v934
        %1014 = vst [vmem:[%s1012 + $0x8] sm:$0xff] %v939
        %1015 = vst [vmem:[%s1012 + $0x10] sm:$0xff] %v944
        %1016 = vst [vmem:[%s1012 + $0x18] sm:$0xff] %v949
        %1017 = vst [vmem:[%s1012 + $0x20] sm:$0xff] %v954
        %1018 = vst [vmem:[%s1012 + $0x28] sm:$0xff] %v959
        %1019 = vst [vmem:[%s1012 + $0x30] sm:$0xff] %v964
        %1020 = vst [vmem:[%s1012 + $0x38] sm:$0xff] %v969
        %1021 = vst [vmem:[%s1012 + $0x40] sm:$0xff] %v974
        %1022 = vst [vmem:[%s1012 + $0x48] sm:$0xff] %v979
        %1023 = vst [vmem:[%s1012 + $0x50] sm:$0xff] %v984
        %1024 = vst [vmem:[%s1012 + $0x58] sm:$0xff] %v989
        %1025 = vst [vmem:[%s1012 + $0x60] sm:$0xff] %v994
        %1026 = vst [vmem:[%s1012 + $0x68] sm:$0xff] %v999
        %1027 = vst [vmem:[%s1012 + $0x70] sm:$0xff] %v1004
        %1028 = vst [vmem:[%s1012 + $0x78] sm:$0xff] %v1009
        %1029 = vrot.lane.b32.xlu0 %v468, 112
        %v1030 = vpop.permute.xlu0 %1029
        %1031 = vrot.lane.b32.xlu0 %v473, 112
        %v1032 = vpop.permute.xlu0 %1031
        %1033 = vrot.lane.b32.xlu0 %v478, 112
        %v1034 = vpop.permute.xlu0 %1033
        %1035 = vrot.lane.b32.xlu0 %v483, 112
        %v1036 = vpop.permute.xlu0 %1035
        %1037 = vrot.lane.b32.xlu0 %v488, 112
        %v1038 = vpop.permute.xlu0 %1037
        %1039 = vrot.lane.b32.xlu0 %v493, 112
        %v1040 = vpop.permute.xlu0 %1039
        %1041 = vrot.lane.b32.xlu0 %v498, 112
        %v1042 = vpop.permute.xlu0 %1041
        %1043 = vrot.lane.b32.xlu0 %v503, 112
        %v1044 = vpop.permute.xlu0 %1043
        %1045 = vrot.lane.b32.xlu0 %v508, 112
        %v1046 = vpop.permute.xlu0 %1045
        %1047 = vrot.lane.b32.xlu0 %v513, 112
        %v1048 = vpop.permute.xlu0 %1047
        %1049 = vrot.lane.b32.xlu0 %v518, 112
        %v1050 = vpop.permute.xlu0 %1049
        %1051 = vrot.lane.b32.xlu0 %v523, 112
        %v1052 = vpop.permute.xlu0 %1051
        %1053 = vrot.lane.b32.xlu0 %v528, 112
        %v1054 = vpop.permute.xlu0 %1053
        %1055 = vrot.lane.b32.xlu0 %v533, 112
        %v1056 = vpop.permute.xlu0 %1055
        %1057 = vrot.lane.b32.xlu0 %v538, 112
        %v1058 = vpop.permute.xlu0 %1057
        %1059 = vrot.lane.b32.xlu0 %v543, 112
        %v1060 = vpop.permute.xlu0 %1059
        %v1061 = vsel %vm352, %v1030, 0
        %v1063 = vsel %vm352, %v1032, 0
        %v1065 = vsel %vm352, %v1034, 0
        %v1067 = vsel %vm352, %v1036, 0
        %v1069 = vsel %vm352, %v1038, 0
        %v1071 = vsel %vm352, %v1040, 0
        %v1073 = vsel %vm352, %v1042, 0
        %v1075 = vsel %vm352, %v1044, 0
        %v1077 = vsel %vm352, %v1046, 0
        %v1079 = vsel %vm352, %v1048, 0
        %v1081 = vsel %vm352, %v1050, 0
        %v1083 = vsel %vm352, %v1052, 0
        %v1085 = vsel %vm352, %v1054, 0
        %v1087 = vsel %vm352, %v1056, 0
        %v1089 = vsel %vm352, %v1058, 0
        %v1091 = vsel %vm352, %v1060, 0
        %1093 = vmatprep.subr.mxu0 0.0
        %1094 = vmatpush1.xpose.msra.mxu0 %v595
        %1095 = vmatprep.subr.mxu0 0.0
        %1096 = vmatpush1.xpose.msra.mxu0 %v598
        %1097 = vmatprep.subr.mxu0 0.0
        %1098 = vmatpush1.xpose.msra.mxu0 %v601
        %1099 = vmatprep.subr.mxu0 0.0
        %1100 = vmatpush1.xpose.msra.mxu0 %v604
        %1101 = vmatprep.subr.mxu0 0.0
        %1102 = vmatpush1.xpose.msra.mxu0 %v607
        %1103 = vmatprep.subr.mxu0 0.0
        %1104 = vmatpush1.xpose.msra.mxu0 %v610
        %1105 = vmatprep.subr.mxu0 0.0
        %1106 = vmatpush1.xpose.msra.mxu0 %v613
        %1107 = vmatprep.subr.mxu0 0.0
        %1108 = vmatpush1.xpose.msra.mxu0 %v616
        %1109 = vmatprep.subr.mxu0 0.0
        %1110 = vmatpush1.xpose.msra.mxu0 %v619
        %1111 = vmatprep.subr.mxu0 0.0
        %1112 = vmatpush1.xpose.msra.mxu0 %v622
        %1113 = vmatprep.subr.mxu0 0.0
        %1114 = vmatpush1.xpose.msra.mxu0 %v625
        %1115 = vmatprep.subr.mxu0 0.0
        %1116 = vmatpush1.xpose.msra.mxu0 %v628
        %1117 = vmatprep.subr.mxu0 0.0
        %1118 = vmatpush1.xpose.msra.mxu0 %v631
        %1119 = vmatprep.subr.mxu0 0.0
        %1120 = vmatpush1.xpose.msra.mxu0 %v634
        %1121 = vmatprep.subr.mxu0 0.0
        %1122 = vmatpush1.xpose.msra.mxu0 %v637
        %1123 = vmatprep.subr.mxu0 0.0
        %1124 = vmatpush1.xpose.msra.mxu0 %v640
        %1125 = vmatprep.subr.mxu0 0.0
        %1126 = vmatpush1.xpose.msra.mxu0 0.0
        %1127 = vmatprep.subr.mxu0 0.0
        %1128 = vmatpush1.xpose.msra.mxu0 0.0
        %1129 = vmatprep.subr.mxu0 0.0
        %1130 = vmatpush1.xpose.msra.mxu0 0.0
        %1131 = vmatprep.subr.mxu0 0.0
        %1132 = vmatpush1.xpose.msra.mxu0 0.0
        %1133 = vmatprep.subr.mxu0 0.0
        %1134 = vmatpush1.xpose.msra.mxu0 0.0
        %1135 = vmatprep.subr.mxu0 0.0
        %1136 = vmatpush1.xpose.msra.mxu0 0.0
        %1137 = vmatprep.subr.mxu0 0.0
        %1138 = vmatpush1.xpose.msra.mxu0 0.0
        %1139 = vmatprep.subr.mxu0 0.0
        %1140 = vmatpush1.xpose.msra.mxu0 0.0
        %1141 = vmatprep.subr.mxu0 0.0
        %1142 = vmatpush1.xpose.msra.mxu0 0.0
        %1143 = vmatprep.subr.mxu0 0.0
        %1144 = vmatpush1.xpose.msra.mxu0 0.0
        %1145 = vmatprep.subr.mxu0 0.0
        %1146 = vmatpush1.xpose.msra.mxu0 0.0
        %1147 = vmatprep.subr.mxu0 0.0
        %1148 = vmatpush1.xpose.msra.mxu0 0.0
        %1149 = vmatprep.subr.mxu0 0.0
        %1150 = vmatpush1.xpose.msra.mxu0 0.0
        %1151 = vmatprep.subr.mxu0 0.0
        %1152 = vmatpush1.xpose.msra.mxu0 0.0
        %1153 = vmatprep.subr.mxu0 0.0
        %1154 = vmatpush1.xpose.msra.mxu0 0.0
        %1155 = vmatprep.subr.mxu0 0.0
        %1156 = vmatpush1.xpose.msra.mxu0 0.0
        %1157 = vmatprep.mubr.f32.mxu0 0.0
        %1158 = vmatmul.mubr.f32.gmra.mrb[0].mxu0 %v1061
        %v1159 = vpop.f32.mrb[0].mxu0
        %v1160 = vadd.f32 0.0, %v1159
        %v1161 = vpop.f32.mrb[0].mxu0
        %1162 = vmatprep.mubr.f32.mxu0 0.0
        %1163 = vmatmul.mubr.f32.gmra.mrb[0].mxu0 %v1063
        %v1164 = vpop.f32.mrb[0].mxu0
        %v1165 = vadd.f32 0.0, %v1164
        %v1166 = vpop.f32.mrb[0].mxu0
        %1167 = vmatprep.mubr.f32.mxu0 0.0
        %1168 = vmatmul.mubr.f32.gmra.mrb[0].mxu0 %v1065
        %v1169 = vpop.f32.mrb[0].mxu0
        %v1170 = vadd.f32 0.0, %v1169
        %v1171 = vpop.f32.mrb[0].mxu0
        %1172 = vmatprep.mubr.f32.mxu0 0.0
        %1173 = vmatmul.mubr.f32.gmra.mrb[0].mxu0 %v1067
        %v1174 = vpop.f32.mrb[0].mxu0
        %v1175 = vadd.f32 0.0, %v1174
        %v1176 = vpop.f32.mrb[0].mxu0
        %1177 = vmatprep.mubr.f32.mxu0 0.0
        %1178 = vmatmul.mubr.f32.gmra.mrb[0].mxu0 %v1069
        %v1179 = vpop.f32.mrb[0].mxu0
        %v1180 = vadd.f32 0.0, %v1179
        %v1181 = vpop.f32.mrb[0].mxu0
        %1182 = vmatprep.mubr.f32.mxu0 0.0
        %1183 = vmatmul.mubr.f32.gmra.mrb[0].mxu0 %v1071
        %v1184 = vpop.f32.mrb[0].mxu0
        %v1185 = vadd.f32 0.0, %v1184
        %v1186 = vpop.f32.mrb[0].mxu0
        %1187 = vmatprep.mubr.f32.mxu0 0.0
        %1188 = vmatmul.mubr.f32.gmra.mrb[0].mxu0 %v1073
        %v1189 = vpop.f32.mrb[0].mxu0
        %v1190 = vadd.f32 0.0, %v1189
        %v1191 = vpop.f32.mrb[0].mxu0
        %1192 = vmatprep.mubr.f32.mxu0 0.0
        %1193 = vmatmul.mubr.f32.gmra.mrb[0].mxu0 %v1075
        %v1194 = vpop.f32.mrb[0].mxu0
        %v1195 = vadd.f32 0.0, %v1194
        %v1196 = vpop.f32.mrb[0].mxu0
        %1197 = vmatprep.mubr.f32.mxu0 0.0
        %1198 = vmatmul.mubr.f32.gmra.mrb[0].mxu0 %v1077
        %v1199 = vpop.f32.mrb[0].mxu0
        %v1200 = vadd.f32 0.0, %v1199
        %v1201 = vpop.f32.mrb[0].mxu0
        %1202 = vmatprep.mubr.f32.mxu0 0.0
        %1203 = vmatmul.mubr.f32.gmra.mrb[0].mxu0 %v1079
        %v1204 = vpop.f32.mrb[0].mxu0
        %v1205 = vadd.f32 0.0, %v1204
        %v1206 = vpop.f32.mrb[0].mxu0
        %1207 = vmatprep.mubr.f32.mxu0 0.0
        %1208 = vmatmul.mubr.f32.gmra.mrb[0].mxu0 %v1081
        %v1209 = vpop.f32.mrb[0].mxu0
        %v1210 = vadd.f32 0.0, %v1209
        %v1211 = vpop.f32.mrb[0].mxu0
        %1212 = vmatprep.mubr.f32.mxu0 0.0
        %1213 = vmatmul.mubr.f32.gmra.mrb[0].mxu0 %v1083
        %v1214 = vpop.f32.mrb[0].mxu0
        %v1215 = vadd.f32 0.0, %v1214
        %v1216 = vpop.f32.mrb[0].mxu0
        %1217 = vmatprep.mubr.f32.mxu0 0.0
        %1218 = vmatmul.mubr.f32.gmra.mrb[0].mxu0 %v1085
        %v1219 = vpop.f32.mrb[0].mxu0
        %v1220 = vadd.f32 0.0, %v1219
        %v1221 = vpop.f32.mrb[0].mxu0
        %1222 = vmatprep.mubr.f32.mxu0 0.0
        %1223 = vmatmul.mubr.f32.gmra.mrb[0].mxu0 %v1087
        %v1224 = vpop.f32.mrb[0].mxu0
        %v1225 = vadd.f32 0.0, %v1224
        %v1226 = vpop.f32.mrb[0].mxu0
        %1227 = vmatprep.mubr.f32.mxu0 0.0
        %1228 = vmatmul.mubr.f32.gmra.mrb[0].mxu0 %v1089
        %v1229 = vpop.f32.mrb[0].mxu0
        %v1230 = vadd.f32 0.0, %v1229
        %v1231 = vpop.f32.mrb[0].mxu0
        %1232 = vmatprep.mubr.f32.mxu0 0.0
        %1233 = vmatmul.mubr.f32.gmra.mrb[0].mxu0 %v1091
        %v1234 = vpop.f32.mrb[0].mxu0
        %v1235 = vadd.f32 0.0, %v1234
        %v1236 = vpop.f32.mrb[0].mxu0
        %1237 = vdwg.mxu0
        %s1238 = scalar_lea.vmem %s289, 256 [#allocation5]
        %1239 = vst [vmem:[%s1238] sm:$0xff] %v1160
        %1240 = vst [vmem:[%s1238 + $0x8] sm:$0xff] %v1165
        %1241 = vst [vmem:[%s1238 + $0x10] sm:$0xff] %v1170
        %1242 = vst [vmem:[%s1238 + $0x18] sm:$0xff] %v1175
        %1243 = vst [vmem:[%s1238 + $0x20] sm:$0xff] %v1180
        %1244 = vst [vmem:[%s1238 + $0x28] sm:$0xff] %v1185
        %1245 = vst [vmem:[%s1238 + $0x30] sm:$0xff] %v1190
        %1246 = vst [vmem:[%s1238 + $0x38] sm:$0xff] %v1195
        %1247 = vst [vmem:[%s1238 + $0x40] sm:$0xff] %v1200
        %1248 = vst [vmem:[%s1238 + $0x48] sm:$0xff] %v1205
        %1249 = vst [vmem:[%s1238 + $0x50] sm:$0xff] %v1210
        %1250 = vst [vmem:[%s1238 + $0x58] sm:$0xff] %v1215
        %1251 = vst [vmem:[%s1238 + $0x60] sm:$0xff] %v1220
        %1252 = vst [vmem:[%s1238 + $0x68] sm:$0xff] %v1225
        %1253 = vst [vmem:[%s1238 + $0x70] sm:$0xff] %v1230
        %1254 = vst [vmem:[%s1238 + $0x78] sm:$0xff] %v1235
        %1255 = vrot.lane.b32.xlu0 %v468, 104
        %v1256 = vpop.permute.xlu0 %1255
        %1257 = vrot.lane.b32.xlu0 %v473, 104
        %v1258 = vpop.permute.xlu0 %1257
        %1259 = vrot.lane.b32.xlu0 %v478, 104
        %v1260 = vpop.permute.xlu0 %1259
        %1261 = vrot.lane.b32.xlu0 %v483, 104
        %v1262 = vpop.permute.xlu0 %1261
        %1263 = vrot.lane.b32.xlu0 %v488, 104
        %v1264 = vpop.permute.xlu0 %1263
        %1265 = vrot.lane.b32.xlu0 %v493, 104
        %v1266 = vpop.permute.xlu0 %1265
        %1267 = vrot.lane.b32.xlu0 %v498, 104
        %v1268 = vpop.permute.xlu0 %1267
        %1269 = vrot.lane.b32.xlu0 %v503, 104
        %v1270 = vpop.permute.xlu0 %1269
        %1271 = vrot.lane.b32.xlu0 %v508, 104
        %v1272 = vpop.permute.xlu0 %1271
        %1273 = vrot.lane.b32.xlu0 %v513, 104
        %v1274 = vpop.permute.xlu0 %1273
        %1275 = vrot.lane.b32.xlu0 %v518, 104
        %v1276 = vpop.permute.xlu0 %1275
        %1277 = vrot.lane.b32.xlu0 %v523, 104
        %v1278 = vpop.permute.xlu0 %1277
        %1279 = vrot.lane.b32.xlu0 %v528, 104
        %v1280 = vpop.permute.xlu0 %1279
        %1281 = vrot.lane.b32.xlu0 %v533, 104
        %v1282 = vpop.permute.xlu0 %1281
        %1283 = vrot.lane.b32.xlu0 %v538, 104
        %v1284 = vpop.permute.xlu0 %1283
        %1285 = vrot.lane.b32.xlu0 %v543, 104
        %v1286 = vpop.permute.xlu0 %1285
        %v1287 = vsel %vm352, %v1256, 0
        %v1289 = vsel %vm352, %v1258, 0
        %v1291 = vsel %vm352, %v1260, 0
        %v1293 = vsel %vm352, %v1262, 0
        %v1295 = vsel %vm352, %v1264, 0
        %v1297 = vsel %vm352, %v1266, 0
        %v1299 = vsel %vm352, %v1268, 0
        %v1301 = vsel %vm352, %v1270, 0
        %v1303 = vsel %vm352, %v1272, 0
        %v1305 = vsel %vm352, %v1274, 0
        %v1307 = vsel %vm352, %v1276, 0
        %v1309 = vsel %vm352, %v1278, 0
        %v1311 = vsel %vm352, %v1280, 0
        %v1313 = vsel %vm352, %v1282, 0
        %v1315 = vsel %vm352, %v1284, 0
        %v1317 = vsel %vm352, %v1286, 0
        %1319 = vmatprep.subr.mxu0 0.0
        %1320 = vmatpush1.xpose.msra.mxu0 %v595
        %1321 = vmatprep.subr.mxu0 0.0
        %1322 = vmatpush1.xpose.msra.mxu0 %v598
        %1323 = vmatprep.subr.mxu0 0.0
        %1324 = vmatpush1.xpose.msra.mxu0 %v601
        %1325 = vmatprep.subr.mxu0 0.0
        %1326 = vmatpush1.xpose.msra.mxu0 %v604
        %1327 = vmatprep.subr.mxu0 0.0
        %1328 = vmatpush1.xpose.msra.mxu0 %v607
        %1329 = vmatprep.subr.mxu0 0.0
        %1330 = vmatpush1.xpose.msra.mxu0 %v610
        %1331 = vmatprep.subr.mxu0 0.0
        %1332 = vmatpush1.xpose.msra.mxu0 %v613
        %1333 = vmatprep.subr.mxu0 0.0
        %1334 = vmatpush1.xpose.msra.mxu0 %v616
        %1335 = vmatprep.subr.mxu0 0.0
        %1336 = vmatpush1.xpose.msra.mxu0 %v619
        %1337 = vmatprep.subr.mxu0 0.0
        %1338 = vmatpush1.xpose.msra.mxu0 %v622
        %1339 = vmatprep.subr.mxu0 0.0
        %1340 = vmatpush1.xpose.msra.mxu0 %v625
        %1341 = vmatprep.subr.mxu0 0.0
        %1342 = vmatpush1.xpose.msra.mxu0 %v628
        %1343 = vmatprep.subr.mxu0 0.0
        %1344 = vmatpush1.xpose.msra.mxu0 %v631
        %1345 = vmatprep.subr.mxu0 0.0
        %1346 = vmatpush1.xpose.msra.mxu0 %v634
        %1347 = vmatprep.subr.mxu0 0.0
        %1348 = vmatpush1.xpose.msra.mxu0 %v637
        %1349 = vmatprep.subr.mxu0 0.0
        %1350 = vmatpush1.xpose.msra.mxu0 %v640
        %1351 = vmatprep.subr.mxu0 0.0
        %1352 = vmatpush1.xpose.msra.mxu0 0.0
        %1353 = vmatprep.subr.mxu0 0.0
        %1354 = vmatpush1.xpose.msra.mxu0 0.0
        %1355 = vmatprep.subr.mxu0 0.0
        %1356 = vmatpush1.xpose.msra.mxu0 0.0
        %1357 = vmatprep.subr.mxu0 0.0
        %1358 = vmatpush1.xpose.msra.mxu0 0.0
        %1359 = vmatprep.subr.mxu0 0.0
        %1360 = vmatpush1.xpose.msra.mxu0 0.0
        %1361 = vmatprep.subr.mxu0 0.0
        %1362 = vmatpush1.xpose.msra.mxu0 0.0
        %1363 = vmatprep.subr.mxu0 0.0
        %1364 = vmatpush1.xpose.msra.mxu0 0.0
        %1365 = vmatprep.subr.mxu0 0.0
        %1366 = vmatpush1.xpose.msra.mxu0 0.0
        %1367 = vmatprep.subr.mxu0 0.0
        %1368 = vmatpush1.xpose.msra.mxu0 0.0
        %1369 = vmatprep.subr.mxu0 0.0
        %1370 = vmatpush1.xpose.msra.mxu0 0.0
        %1371 = vmatprep.subr.mxu0 0.0
        %1372 = vmatpush1.xpose.msra.mxu0 0.0
        %1373 = vmatprep.subr.mxu0 0.0
        %1374 = vmatpush1.xpose.msra.mxu0 0.0
        %1375 = vmatprep.subr.mxu0 0.0
        %1376 = vmatpush1.xpose.msra.mxu0 0.0
        %1377 = vmatprep.subr.mxu0 0.0
        %1378 = vmatpush1.xpose.msra.mxu0 0.0
        %1379 = vmatprep.subr.mxu0 0.0
        %1380 = vmatpush1.xpose.msra.mxu0 0.0
        %1381 = vmatprep.subr.mxu0 0.0
        %1382 = vmatpush1.xpose.msra.mxu0 0.0
        %1383 = vmatprep.mubr.f32.mxu0 0.0
        %1384 = vmatmul.mubr.f32.gmra.mrb[0].mxu0 %v1287
        %v1385 = vpop.f32.mrb[0].mxu0
        %v1386 = vadd.f32 0.0, %v1385
        %v1387 = vpop.f32.mrb[0].mxu0
        %1388 = vmatprep.mubr.f32.mxu0 0.0
        %1389 = vmatmul.mubr.f32.gmra.mrb[0].mxu0 %v1289
        %v1390 = vpop.f32.mrb[0].mxu0
        %v1391 = vadd.f32 0.0, %v1390
        %v1392 = vpop.f32.mrb[0].mxu0
        %1393 = vmatprep.mubr.f32.mxu0 0.0
        %1394 = vmatmul.mubr.f32.gmra.mrb[0].mxu0 %v1291
        %v1395 = vpop.f32.mrb[0].mxu0
        %v1396 = vadd.f32 0.0, %v1395
        %v1397 = vpop.f32.mrb[0].mxu0
        %1398 = vmatprep.mubr.f32.mxu0 0.0
        %1399 = vmatmul.mubr.f32.gmra.mrb[0].mxu0 %v1293
        %v1400 = vpop.f32.mrb[0].mxu0
        %v1401 = vadd.f32 0.0, %v1400
        %v1402 = vpop.f32.mrb[0].mxu0
        %1403 = vmatprep.mubr.f32.mxu0 0.0
        %1404 = vmatmul.mubr.f32.gmra.mrb[0].mxu0 %v1295
        %v1405 = vpop.f32.mrb[0].mxu0
        %v1406 = vadd.f32 0.0, %v1405
        %v1407 = vpop.f32.mrb[0].mxu0
        %1408 = vmatprep.mubr.f32.mxu0 0.0
        %1409 = vmatmul.mubr.f32.gmra.mrb[0].mxu0 %v1297
        %v1410 = vpop.f32.mrb[0].mxu0
        %v1411 = vadd.f32 0.0, %v1410
        %v1412 = vpop.f32.mrb[0].mxu0
        %1413 = vmatprep.mubr.f32.mxu0 0.0
        %1414 = vmatmul.mubr.f32.gmra.mrb[0].mxu0 %v1299
        %v1415 = vpop.f32.mrb[0].mxu0
        %v1416 = vadd.f32 0.0, %v1415
        %v1417 = vpop.f32.mrb[0].mxu0
        %1418 = vmatprep.mubr.f32.mxu0 0.0
        %1419 = vmatmul.mubr.f32.gmra.mrb[0].mxu0 %v1301
        %v1420 = vpop.f32.mrb[0].mxu0
        %v1421 = vadd.f32 0.0, %v1420
        %v1422 = vpop.f32.mrb[0].mxu0
        %1423 = vmatprep.mubr.f32.mxu0 0.0
        %1424 = vmatmul.mubr.f32.gmra.mrb[0].mxu0 %v1303
        %v1425 = vpop.f32.mrb[0].mxu0
        %v1426 = vadd.f32 0.0, %v1425
        %v1427 = vpop.f32.mrb[0].mxu0
        %1428 = vmatprep.mubr.f32.mxu0 0.0
        %1429 = vmatmul.mubr.f32.gmra.mrb[0].mxu0 %v1305
        %v1430 = vpop.f32.mrb[0].mxu0
        %v1431 = vadd.f32 0.0, %v1430
        %v1432 = vpop.f32.mrb[0].mxu0
        %1433 = vmatprep.mubr.f32.mxu0 0.0
        %1434 = vmatmul.mubr.f32.gmra.mrb[0].mxu0 %v1307
        %v1435 = vpop.f32.mrb[0].mxu0
        %v1436 = vadd.f32 0.0, %v1435
        %v1437 = vpop.f32.mrb[0].mxu0
        %1438 = vmatprep.mubr.f32.mxu0 0.0
        %1439 = vmatmul.mubr.f32.gmra.mrb[0].mxu0 %v1309
        %v1440 = vpop.f32.mrb[0].mxu0
        %v1441 = vadd.f32 0.0, %v1440
        %v1442 = vpop.f32.mrb[0].mxu0
        %1443 = vmatprep.mubr.f32.mxu0 0.0
        %1444 = vmatmul.mubr.f32.gmra.mrb[0].mxu0 %v1311
        %v1445 = vpop.f32.mrb[0].mxu0
        %v1446 = vadd.f32 0.0, %v1445
        %v1447 = vpop.f32.mrb[0].mxu0
        %1448 = vmatprep.mubr.f32.mxu0 0.0
        %1449 = vmatmul.mubr.f32.gmra.mrb[0].mxu0 %v1313
        %v1450 = vpop.f32.mrb[0].mxu0
        %v1451 = vadd.f32 0.0, %v1450
        %v1452 = vpop.f32.mrb[0].mxu0
        %1453 = vmatprep.mubr.f32.mxu0 0.0
        %1454 = vmatmul.mubr.f32.gmra.mrb[0].mxu0 %v1315
        %v1455 = vpop.f32.mrb[0].mxu0
        %v1456 = vadd.f32 0.0, %v1455
        %v1457 = vpop.f32.mrb[0].mxu0
        %1458 = vmatprep.mubr.f32.mxu0 0.0
        %1459 = vmatmul.mubr.f32.gmra.mrb[0].mxu0 %v1317
        %v1460 = vpop.f32.mrb[0].mxu0
        %v1461 = vadd.f32 0.0, %v1460
        %v1462 = vpop.f32.mrb[0].mxu0
        %1463 = vdwg.mxu0
        %s1464 = scalar_lea.vmem %s289, 384 [#allocation5]
        %1465 = vst [vmem:[%s1464] sm:$0xff] %v1386
        %1466 = vst [vmem:[%s1464 + $0x8] sm:$0xff] %v1391
        %1467 = vst [vmem:[%s1464 + $0x10] sm:$0xff] %v1396
        %1468 = vst [vmem:[%s1464 + $0x18] sm:$0xff] %v1401
        %1469 = vst [vmem:[%s1464 + $0x20] sm:$0xff] %v1406
        %1470 = vst [vmem:[%s1464 + $0x28] sm:$0xff] %v1411
        %1471 = vst [vmem:[%s1464 + $0x30] sm:$0xff] %v1416
        %1472 = vst [vmem:[%s1464 + $0x38] sm:$0xff] %v1421
        %1473 = vst [vmem:[%s1464 + $0x40] sm:$0xff] %v1426
        %1474 = vst [vmem:[%s1464 + $0x48] sm:$0xff] %v1431
        %1475 = vst [vmem:[%s1464 + $0x50] sm:$0xff] %v1436
        %1476 = vst [vmem:[%s1464 + $0x58] sm:$0xff] %v1441
        %1477 = vst [vmem:[%s1464 + $0x60] sm:$0xff] %v1446
        %1478 = vst [vmem:[%s1464 + $0x68] sm:$0xff] %v1451
        %1479 = vst [vmem:[%s1464 + $0x70] sm:$0xff] %v1456
        %1480 = vst [vmem:[%s1464 + $0x78] sm:$0xff] %v1461
        %1481 = vrot.lane.b32.xlu0 %v468, 96
        %v1482 = vpop.permute.xlu0 %1481
        %1483 = vrot.lane.b32.xlu0 %v473, 96
        %v1484 = vpop.permute.xlu0 %1483
        %1485 = vrot.lane.b32.xlu0 %v478, 96
        %v1486 = vpop.permute.xlu0 %1485
        %1487 = vrot.lane.b32.xlu0 %v483, 96
        %v1488 = vpop.permute.xlu0 %1487
        %1489 = vrot.lane.b32.xlu0 %v488, 96
        %v1490 = vpop.permute.xlu0 %1489
        %1491 = vrot.lane.b32.xlu0 %v493, 96
        %v1492 = vpop.permute.xlu0 %1491
        %1493 = vrot.lane.b32.xlu0 %v498, 96
        %v1494 = vpop.permute.xlu0 %1493
        %1495 = vrot.lane.b32.xlu0 %v503, 96
        %v1496 = vpop.permute.xlu0 %1495
        %1497 = vrot.lane.b32.xlu0 %v508, 96
        %v1498 = vpop.permute.xlu0 %1497
        %1499 = vrot.lane.b32.xlu0 %v513, 96
        %v1500 = vpop.permute.xlu0 %1499
        %1501 = vrot.lane.b32.xlu0 %v518, 96
        %v1502 = vpop.permute.xlu0 %1501
        %1503 = vrot.lane.b32.xlu0 %v523, 96
        %v1504 = vpop.permute.xlu0 %1503
        %1505 = vrot.lane.b32.xlu0 %v528, 96
        %v1506 = vpop.permute.xlu0 %1505
        %1507 = vrot.lane.b32.xlu0 %v533, 96
        %v1508 = vpop.permute.xlu0 %1507
        %1509 = vrot.lane.b32.xlu0 %v538, 96
        %v1510 = vpop.permute.xlu0 %1509
        %1511 = vrot.lane.b32.xlu0 %v543, 96
        %v1512 = vpop.permute.xlu0 %1511
        %v1513 = vsel %vm352, %v1482, 0
        %v1515 = vsel %vm352, %v1484, 0
        %v1517 = vsel %vm352, %v1486, 0
        %v1519 = vsel %vm352, %v1488, 0
        %v1521 = vsel %vm352, %v1490, 0
        %v1523 = vsel %vm352, %v1492, 0
        %v1525 = vsel %vm352, %v1494, 0
        %v1527 = vsel %vm352, %v1496, 0
        %v1529 = vsel %vm352, %v1498, 0
        %v1531 = vsel %vm352, %v1500, 0
        %v1533 = vsel %vm352, %v1502, 0
        %v1535 = vsel %vm352, %v1504, 0
        %v1537 = vsel %vm352, %v1506, 0
        %v1539 = vsel %vm352, %v1508, 0
        %v1541 = vsel %vm352, %v1510, 0
        %v1543 = vsel %vm352, %v1512, 0
        %1545 = vmatprep.subr.mxu0 0.0
        %1546 = vmatpush1.xpose.msra.mxu0 %v595
        %1547 = vmatprep.subr.mxu0 0.0
        %1548 = vmatpush1.xpose.msra.mxu0 %v598
        %1549 = vmatprep.subr.mxu0 0.0
        %1550 = vmatpush1.xpose.msra.mxu0 %v601
        %1551 = vmatprep.subr.mxu0 0.0
        %1552 = vmatpush1.xpose.msra.mxu0 %v604
        %1553 = vmatprep.subr.mxu0 0.0
        %1554 = vmatpush1.xpose.msra.mxu0 %v607
        %1555 = vmatprep.subr.mxu0 0.0
        %1556 = vmatpush1.xpose.msra.mxu0 %v610
        %1557 = vmatprep.subr.mxu0 0.0
        %1558 = vmatpush1.xpose.msra.mxu0 %v613
        %1559 = vmatprep.subr.mxu0 0.0
        %1560 = vmatpush1.xpose.msra.mxu0 %v616
        %1561 = vmatprep.subr.mxu0 0.0
        %1562 = vmatpush1.xpose.msra.mxu0 %v619
        %1563 = vmatprep.subr.mxu0 0.0
        %1564 = vmatpush1.xpose.msra.mxu0 %v622
        %1565 = vmatprep.subr.mxu0 0.0
        %1566 = vmatpush1.xpose.msra.mxu0 %v625
        %1567 = vmatprep.subr.mxu0 0.0
        %1568 = vmatpush1.xpose.msra.mxu0 %v628
        %1569 = vmatprep.subr.mxu0 0.0
        %1570 = vmatpush1.xpose.msra.mxu0 %v631
        %1571 = vmatprep.subr.mxu0 0.0
        %1572 = vmatpush1.xpose.msra.mxu0 %v634
        %1573 = vmatprep.subr.mxu0 0.0
        %1574 = vmatpush1.xpose.msra.mxu0 %v637
        %1575 = vmatprep.subr.mxu0 0.0
        %1576 = vmatpush1.xpose.msra.mxu0 %v640
        %1577 = vmatprep.subr.mxu0 0.0
        %1578 = vmatpush1.xpose.msra.mxu0 0.0
        %1579 = vmatprep.subr.mxu0 0.0
        %1580 = vmatpush1.xpose.msra.mxu0 0.0
        %1581 = vmatprep.subr.mxu0 0.0
        %1582 = vmatpush1.xpose.msra.mxu0 0.0
        %1583 = vmatprep.subr.mxu0 0.0
        %1584 = vmatpush1.xpose.msra.mxu0 0.0
        %1585 = vmatprep.subr.mxu0 0.0
        %1586 = vmatpush1.xpose.msra.mxu0 0.0
        %1587 = vmatprep.subr.mxu0 0.0
        %1588 = vmatpush1.xpose.msra.mxu0 0.0
        %1589 = vmatprep.subr.mxu0 0.0
        %1590 = vmatpush1.xpose.msra.mxu0 0.0
        %1591 = vmatprep.subr.mxu0 0.0
        %1592 = vmatpush1.xpose.msra.mxu0 0.0
        %1593 = vmatprep.subr.mxu0 0.0
        %1594 = vmatpush1.xpose.msra.mxu0 0.0
        %1595 = vmatprep.subr.mxu0 0.0
        %1596 = vmatpush1.xpose.msra.mxu0 0.0
        %1597 = vmatprep.subr.mxu0 0.0
        %1598 = vmatpush1.xpose.msra.mxu0 0.0
        %1599 = vmatprep.subr.mxu0 0.0
        %1600 = vmatpush1.xpose.msra.mxu0 0.0
        %1601 = vmatprep.subr.mxu0 0.0
        %1602 = vmatpush1.xpose.msra.mxu0 0.0
        %1603 = vmatprep.subr.mxu0 0.0
        %1604 = vmatpush1.xpose.msra.mxu0 0.0
        %1605 = vmatprep.subr.mxu0 0.0
        %1606 = vmatpush1.xpose.msra.mxu0 0.0
        %1607 = vmatprep.subr.mxu0 0.0
        %1608 = vmatpush1.xpose.msra.mxu0 0.0
        %1609 = vmatprep.mubr.f32.mxu0 0.0
        %1610 = vmatmul.mubr.f32.gmra.mrb[0].mxu0 %v1513
        %v1611 = vpop.f32.mrb[0].mxu0
        %v1612 = vadd.f32 0.0, %v1611
        %v1613 = vpop.f32.mrb[0].mxu0
        %1614 = vmatprep.mubr.f32.mxu0 0.0
        %1615 = vmatmul.mubr.f32.gmra.mrb[0].mxu0 %v1515
        %v1616 = vpop.f32.mrb[0].mxu0
        %v1617 = vadd.f32 0.0, %v1616
        %v1618 = vpop.f32.mrb[0].mxu0
        %1619 = vmatprep.mubr.f32.mxu0 0.0
        %1620 = vmatmul.mubr.f32.gmra.mrb[0].mxu0 %v1517
        %v1621 = vpop.f32.mrb[0].mxu0
        %v1622 = vadd.f32 0.0, %v1621
        %v1623 = vpop.f32.mrb[0].mxu0
        %1624 = vmatprep.mubr.f32.mxu0 0.0
        %1625 = vmatmul.mubr.f32.gmra.mrb[0].mxu0 %v1519
        %v1626 = vpop.f32.mrb[0].mxu0
        %v1627 = vadd.f32 0.0, %v1626
        %v1628 = vpop.f32.mrb[0].mxu0
        %1629 = vmatprep.mubr.f32.mxu0 0.0
        %1630 = vmatmul.mubr.f32.gmra.mrb[0].mxu0 %v1521
        %v1631 = vpop.f32.mrb[0].mxu0
        %v1632 = vadd.f32 0.0, %v1631
        %v1633 = vpop.f32.mrb[0].mxu0
        %1634 = vmatprep.mubr.f32.mxu0 0.0
        %1635 = vmatmul.mubr.f32.gmra.mrb[0].mxu0 %v1523
        %v1636 = vpop.f32.mrb[0].mxu0
        %v1637 = vadd.f32 0.0, %v1636
        %v1638 = vpop.f32.mrb[0].mxu0
        %1639 = vmatprep.mubr.f32.mxu0 0.0
        %1640 = vmatmul.mubr.f32.gmra.mrb[0].mxu0 %v1525
        %v1641 = vpop.f32.mrb[0].mxu0
        %v1642 = vadd.f32 0.0, %v1641
        %v1643 = vpop.f32.mrb[0].mxu0
        %1644 = vmatprep.mubr.f32.mxu0 0.0
        %1645 = vmatmul.mubr.f32.gmra.mrb[0].mxu0 %v1527
        %v1646 = vpop.f32.mrb[0].mxu0
        %v1647 = vadd.f32 0.0, %v1646
        %v1648 = vpop.f32.mrb[0].mxu0
        %1649 = vmatprep.mubr.f32.mxu0 0.0
        %1650 = vmatmul.mubr.f32.gmra.mrb[0].mxu0 %v1529
        %v1651 = vpop.f32.mrb[0].mxu0
        %v1652 = vadd.f32 0.0, %v1651
        %v1653 = vpop.f32.mrb[0].mxu0
        %1654 = vmatprep.mubr.f32.mxu0 0.0
        %1655 = vmatmul.mubr.f32.gmra.mrb[0].mxu0 %v1531
        %v1656 = vpop.f32.mrb[0].mxu0
        %v1657 = vadd.f32 0.0, %v1656
        %v1658 = vpop.f32.mrb[0].mxu0
        %1659 = vmatprep.mubr.f32.mxu0 0.0
        %1660 = vmatmul.mubr.f32.gmra.mrb[0].mxu0 %v1533
        %v1661 = vpop.f32.mrb[0].mxu0
        %v1662 = vadd.f32 0.0, %v1661
        %v1663 = vpop.f32.mrb[0].mxu0
        %1664 = vmatprep.mubr.f32.mxu0 0.0
        %1665 = vmatmul.mubr.f32.gmra.mrb[0].mxu0 %v1535
        %v1666 = vpop.f32.mrb[0].mxu0
        %v1667 = vadd.f32 0.0, %v1666
        %v1668 = vpop.f32.mrb[0].mxu0
        %1669 = vmatprep.mubr.f32.mxu0 0.0
        %1670 = vmatmul.mubr.f32.gmra.mrb[0].mxu0 %v1537
        %v1671 = vpop.f32.mrb[0].mxu0
        %v1672 = vadd.f32 0.0, %v1671
        %v1673 = vpop.f32.mrb[0].mxu0
        %1674 = vmatprep.mubr.f32.mxu0 0.0
        %1675 = vmatmul.mubr.f32.gmra.mrb[0].mxu0 %v1539
        %v1676 = vpop.f32.mrb[0].mxu0
        %v1677 = vadd.f32 0.0, %v1676
        %v1678 = vpop.f32.mrb[0].mxu0
        %1679 = vmatprep.mubr.f32.mxu0 0.0
        %1680 = vmatmul.mubr.f32.gmra.mrb[0].mxu0 %v1541
        %v1681 = vpop.f32.mrb[0].mxu0
        %v1682 = vadd.f32 0.0, %v1681
        %v1683 = vpop.f32.mrb[0].mxu0
        %1684 = vmatprep.mubr.f32.mxu0 0.0
        %1685 = vmatmul.mubr.f32.gmra.mrb[0].mxu0 %v1543
        %v1686 = vpop.f32.mrb[0].mxu0
        %v1687 = vadd.f32 0.0, %v1686
        %v1688 = vpop.f32.mrb[0].mxu0
        %1689 = vdwg.mxu0
        %s1690 = scalar_lea.vmem %s289, 512 [#allocation5]
        %1691 = vst [vmem:[%s1690] sm:$0xff] %v1612
        %1692 = vst [vmem:[%s1690 + $0x8] sm:$0xff] %v1617
        %1693 = vst [vmem:[%s1690 + $0x10] sm:$0xff] %v1622
        %1694 = vst [vmem:[%s1690 + $0x18] sm:$0xff] %v1627
        %1695 = vst [vmem:[%s1690 + $0x20] sm:$0xff] %v1632
        %1696 = vst [vmem:[%s1690 + $0x28] sm:$0xff] %v1637
        %1697 = vst [vmem:[%s1690 + $0x30] sm:$0xff] %v1642
        %1698 = vst [vmem:[%s1690 + $0x38] sm:$0xff] %v1647
        %1699 = vst [vmem:[%s1690 + $0x40] sm:$0xff] %v1652
        %1700 = vst [vmem:[%s1690 + $0x48] sm:$0xff] %v1657
        %1701 = vst [vmem:[%s1690 + $0x50] sm:$0xff] %v1662
        %1702 = vst [vmem:[%s1690 + $0x58] sm:$0xff] %v1667
        %1703 = vst [vmem:[%s1690 + $0x60] sm:$0xff] %v1672
        %1704 = vst [vmem:[%s1690 + $0x68] sm:$0xff] %v1677
        %1705 = vst [vmem:[%s1690 + $0x70] sm:$0xff] %v1682
        %1706 = vst [vmem:[%s1690 + $0x78] sm:$0xff] %v1687
        %1707 = vrot.lane.b32.xlu0 %v468, 88
        %v1708 = vpop.permute.xlu0 %1707
        %1709 = vrot.lane.b32.xlu0 %v473, 88
        %v1710 = vpop.permute.xlu0 %1709
        %1711 = vrot.lane.b32.xlu0 %v478, 88
        %v1712 = vpop.permute.xlu0 %1711
        %1713 = vrot.lane.b32.xlu0 %v483, 88
        %v1714 = vpop.permute.xlu0 %1713
        %1715 = vrot.lane.b32.xlu0 %v488, 88
        %v1716 = vpop.permute.xlu0 %1715
        %1717 = vrot.lane.b32.xlu0 %v493, 88
        %v1718 = vpop.permute.xlu0 %1717
        %1719 = vrot.lane.b32.xlu0 %v498, 88
        %v1720 = vpop.permute.xlu0 %1719
        %1721 = vrot.lane.b32.xlu0 %v503, 88
        %v1722 = vpop.permute.xlu0 %1721
        %1723 = vrot.lane.b32.xlu0 %v508, 88
        %v1724 = vpop.permute.xlu0 %1723
        %1725 = vrot.lane.b32.xlu0 %v513, 88
        %v1726 = vpop.permute.xlu0 %1725
        %1727 = vrot.lane.b32.xlu0 %v518, 88
        %v1728 = vpop.permute.xlu0 %1727
        %1729 = vrot.lane.b32.xlu0 %v523, 88
        %v1730 = vpop.permute.xlu0 %1729
        %1731 = vrot.lane.b32.xlu0 %v528, 88
        %v1732 = vpop.permute.xlu0 %1731
        %1733 = vrot.lane.b32.xlu0 %v533, 88
        %v1734 = vpop.permute.xlu0 %1733
        %1735 = vrot.lane.b32.xlu0 %v538, 88
        %v1736 = vpop.permute.xlu0 %1735
        %1737 = vrot.lane.b32.xlu0 %v543, 88
        %v1738 = vpop.permute.xlu0 %1737
        %v1739 = vsel %vm352, %v1708, 0
        %v1741 = vsel %vm352, %v1710, 0
        %v1743 = vsel %vm352, %v1712, 0
        %v1745 = vsel %vm352, %v1714, 0
        %v1747 = vsel %vm352, %v1716, 0
        %v1749 = vsel %vm352, %v1718, 0
        %v1751 = vsel %vm352, %v1720, 0
        %v1753 = vsel %vm352, %v1722, 0
        %v1755 = vsel %vm352, %v1724, 0
        %v1757 = vsel %vm352, %v1726, 0
        %v1759 = vsel %vm352, %v1728, 0
        %v1761 = vsel %vm352, %v1730, 0
        %v1763 = vsel %vm352, %v1732, 0
        %v1765 = vsel %vm352, %v1734, 0
        %v1767 = vsel %vm352, %v1736, 0
        %v1769 = vsel %vm352, %v1738, 0
        %1771 = vmatprep.subr.mxu0 0.0
        %1772 = vmatpush1.xpose.msra.mxu0 %v595
        %1773 = vmatprep.subr.mxu0 0.0
        %1774 = vmatpush1.xpose.msra.mxu0 %v598
        %1775 = vmatprep.subr.mxu0 0.0
        %1776 = vmatpush1.xpose.msra.mxu0 %v601
        %1777 = vmatprep.subr.mxu0 0.0
        %1778 = vmatpush1.xpose.msra.mxu0 %v604
        %1779 = vmatprep.subr.mxu0 0.0
        %1780 = vmatpush1.xpose.msra.mxu0 %v607
        %1781 = vmatprep.subr.mxu0 0.0
        %1782 = vmatpush1.xpose.msra.mxu0 %v610
        %1783 = vmatprep.subr.mxu0 0.0
        %1784 = vmatpush1.xpose.msra.mxu0 %v613
        %1785 = vmatprep.subr.mxu0 0.0
        %1786 = vmatpush1.xpose.msra.mxu0 %v616
        %1787 = vmatprep.subr.mxu0 0.0
        %1788 = vmatpush1.xpose.msra.mxu0 %v619
        %1789 = vmatprep.subr.mxu0 0.0
        %1790 = vmatpush1.xpose.msra.mxu0 %v622
        %1791 = vmatprep.subr.mxu0 0.0
        %1792 = vmatpush1.xpose.msra.mxu0 %v625
        %1793 = vmatprep.subr.mxu0 0.0
        %1794 = vmatpush1.xpose.msra.mxu0 %v628
        %1795 = vmatprep.subr.mxu0 0.0
        %1796 = vmatpush1.xpose.msra.mxu0 %v631
        %1797 = vmatprep.subr.mxu0 0.0
        %1798 = vmatpush1.xpose.msra.mxu0 %v634
        %1799 = vmatprep.subr.mxu0 0.0
        %1800 = vmatpush1.xpose.msra.mxu0 %v637
        %1801 = vmatprep.subr.mxu0 0.0
        %1802 = vmatpush1.xpose.msra.mxu0 %v640
        %1803 = vmatprep.subr.mxu0 0.0
        %1804 = vmatpush1.xpose.msra.mxu0 0.0
        %1805 = vmatprep.subr.mxu0 0.0
        %1806 = vmatpush1.xpose.msra.mxu0 0.0
        %1807 = vmatprep.subr.mxu0 0.0
        %1808 = vmatpush1.xpose.msra.mxu0 0.0
        %1809 = vmatprep.subr.mxu0 0.0
        %1810 = vmatpush1.xpose.msra.mxu0 0.0
        %1811 = vmatprep.subr.mxu0 0.0
        %1812 = vmatpush1.xpose.msra.mxu0 0.0
        %1813 = vmatprep.subr.mxu0 0.0
        %1814 = vmatpush1.xpose.msra.mxu0 0.0
        %1815 = vmatprep.subr.mxu0 0.0
        %1816 = vmatpush1.xpose.msra.mxu0 0.0
        %1817 = vmatprep.subr.mxu0 0.0
        %1818 = vmatpush1.xpose.msra.mxu0 0.0
        %1819 = vmatprep.subr.mxu0 0.0
        %1820 = vmatpush1.xpose.msra.mxu0 0.0
        %1821 = vmatprep.subr.mxu0 0.0
        %1822 = vmatpush1.xpose.msra.mxu0 0.0
        %1823 = vmatprep.subr.mxu0 0.0
        %1824 = vmatpush1.xpose.msra.mxu0 0.0
        %1825 = vmatprep.subr.mxu0 0.0
        %1826 = vmatpush1.xpose.msra.mxu0 0.0
        %1827 = vmatprep.subr.mxu0 0.0
        %1828 = vmatpush1.xpose.msra.mxu0 0.0
        %1829 = vmatprep.subr.mxu0 0.0
        %1830 = vmatpush1.xpose.msra.mxu0 0.0
        %1831 = vmatprep.subr.mxu0 0.0
        %1832 = vmatpush1.xpose.msra.mxu0 0.0
        %1833 = vmatprep.subr.mxu0 0.0
        %1834 = vmatpush1.xpose.msra.mxu0 0.0
        %1835 = vmatprep.mubr.f32.mxu0 0.0
        %1836 = vmatmul.mubr.f32.gmra.mrb[0].mxu0 %v1739
        %v1837 = vpop.f32.mrb[0].mxu0
        %v1838 = vadd.f32 0.0, %v1837
        %v1839 = vpop.f32.mrb[0].mxu0
        %1840 = vmatprep.mubr.f32.mxu0 0.0
        %1841 = vmatmul.mubr.f32.gmra.mrb[0].mxu0 %v1741
        %v1842 = vpop.f32.mrb[0].mxu0
        %v1843 = vadd.f32 0.0, %v1842
        %v1844 = vpop.f32.mrb[0].mxu0
        %1845 = vmatprep.mubr.f32.mxu0 0.0
        %1846 = vmatmul.mubr.f32.gmra.mrb[0].mxu0 %v1743
        %v1847 = vpop.f32.mrb[0].mxu0
        %v1848 = vadd.f32 0.0, %v1847
        %v1849 = vpop.f32.mrb[0].mxu0
        %1850 = vmatprep.mubr.f32.mxu0 0.0
        %1851 = vmatmul.mubr.f32.gmra.mrb[0].mxu0 %v1745
        %v1852 = vpop.f32.mrb[0].mxu0
        %v1853 = vadd.f32 0.0, %v1852
        %v1854 = vpop.f32.mrb[0].mxu0
        %1855 = vmatprep.mubr.f32.mxu0 0.0
        %1856 = vmatmul.mubr.f32.gmra.mrb[0].mxu0 %v1747
        %v1857 = vpop.f32.mrb[0].mxu0
        %v1858 = vadd.f32 0.0, %v1857
        %v1859 = vpop.f32.mrb[0].mxu0
        %1860 = vmatprep.mubr.f32.mxu0 0.0
        %1861 = vmatmul.mubr.f32.gmra.mrb[0].mxu0 %v1749
        %v1862 = vpop.f32.mrb[0].mxu0
        %v1863 = vadd.f32 0.0, %v1862
        %v1864 = vpop.f32.mrb[0].mxu0
        %1865 = vmatprep.mubr.f32.mxu0 0.0
        %1866 = vmatmul.mubr.f32.gmra.mrb[0].mxu0 %v1751
        %v1867 = vpop.f32.mrb[0].mxu0
        %v1868 = vadd.f32 0.0, %v1867
        %v1869 = vpop.f32.mrb[0].mxu0
        %1870 = vmatprep.mubr.f32.mxu0 0.0
        %1871 = vmatmul.mubr.f32.gmra.mrb[0].mxu0 %v1753
        %v1872 = vpop.f32.mrb[0].mxu0
        %v1873 = vadd.f32 0.0, %v1872
        %v1874 = vpop.f32.mrb[0].mxu0
        %1875 = vmatprep.mubr.f32.mxu0 0.0
        %1876 = vmatmul.mubr.f32.gmra.mrb[0].mxu0 %v1755
        %v1877 = vpop.f32.mrb[0].mxu0
        %v1878 = vadd.f32 0.0, %v1877
        %v1879 = vpop.f32.mrb[0].mxu0
        %1880 = vmatprep.mubr.f32.mxu0 0.0
        %1881 = vmatmul.mubr.f32.gmra.mrb[0].mxu0 %v1757
        %v1882 = vpop.f32.mrb[0].mxu0
        %v1883 = vadd.f32 0.0, %v1882
        %v1884 = vpop.f32.mrb[0].mxu0
        %1885 = vmatprep.mubr.f32.mxu0 0.0
        %1886 = vmatmul.mubr.f32.gmra.mrb[0].mxu0 %v1759
        %v1887 = vpop.f32.mrb[0].mxu0
        %v1888 = vadd.f32 0.0, %v1887
        %v1889 = vpop.f32.mrb[0].mxu0
        %1890 = vmatprep.mubr.f32.mxu0 0.0
        %1891 = vmatmul.mubr.f32.gmra.mrb[0].mxu0 %v1761
        %v1892 = vpop.f32.mrb[0].mxu0
        %v1893 = vadd.f32 0.0, %v1892
        %v1894 = vpop.f32.mrb[0].mxu0
        %1895 = vmatprep.mubr.f32.mxu0 0.0
        %1896 = vmatmul.mubr.f32.gmra.mrb[0].mxu0 %v1763
        %v1897 = vpop.f32.mrb[0].mxu0
        %v1898 = vadd.f32 0.0, %v1897
        %v1899 = vpop.f32.mrb[0].mxu0
        %1900 = vmatprep.mubr.f32.mxu0 0.0
        %1901 = vmatmul.mubr.f32.gmra.mrb[0].mxu0 %v1765
        %v1902 = vpop.f32.mrb[0].mxu0
        %v1903 = vadd.f32 0.0, %v1902
        %v1904 = vpop.f32.mrb[0].mxu0
        %1905 = vmatprep.mubr.f32.mxu0 0.0
        %1906 = vmatmul.mubr.f32.gmra.mrb[0].mxu0 %v1767
        %v1907 = vpop.f32.mrb[0].mxu0
        %v1908 = vadd.f32 0.0, %v1907
        %v1909 = vpop.f32.mrb[0].mxu0
        %1910 = vmatprep.mubr.f32.mxu0 0.0
        %1911 = vmatmul.mubr.f32.gmra.mrb[0].mxu0 %v1769
        %v1912 = vpop.f32.mrb[0].mxu0
        %v1913 = vadd.f32 0.0, %v1912
        %v1914 = vpop.f32.mrb[0].mxu0
        %1915 = vdwg.mxu0
        %s1916 = scalar_lea.vmem %s289, 640 [#allocation5]
        %1917 = vst [vmem:[%s1916] sm:$0xff] %v1838
        %1918 = vst [vmem:[%s1916 + $0x8] sm:$0xff] %v1843
        %1919 = vst [vmem:[%s1916 + $0x10] sm:$0xff] %v1848
        %1920 = vst [vmem:[%s1916 + $0x18] sm:$0xff] %v1853
        %1921 = vst [vmem:[%s1916 + $0x20] sm:$0xff] %v1858
        %1922 = vst [vmem:[%s1916 + $0x28] sm:$0xff] %v1863
        %1923 = vst [vmem:[%s1916 + $0x30] sm:$0xff] %v1868
        %1924 = vst [vmem:[%s1916 + $0x38] sm:$0xff] %v1873
        %1925 = vst [vmem:[%s1916 + $0x40] sm:$0xff] %v1878
        %1926 = vst [vmem:[%s1916 + $0x48] sm:$0xff] %v1883
        %1927 = vst [vmem:[%s1916 + $0x50] sm:$0xff] %v1888
        %1928 = vst [vmem:[%s1916 + $0x58] sm:$0xff] %v1893
        %1929 = vst [vmem:[%s1916 + $0x60] sm:$0xff] %v1898
        %1930 = vst [vmem:[%s1916 + $0x68] sm:$0xff] %v1903
        %1931 = vst [vmem:[%s1916 + $0x70] sm:$0xff] %v1908
        %1932 = vst [vmem:[%s1916 + $0x78] sm:$0xff] %v1913
        %1933 = vrot.lane.b32.xlu0 %v468, 80
        %v1934 = vpop.permute.xlu0 %1933
        %1935 = vrot.lane.b32.xlu0 %v473, 80
        %v1936 = vpop.permute.xlu0 %1935
        %1937 = vrot.lane.b32.xlu0 %v478, 80
        %v1938 = vpop.permute.xlu0 %1937
        %1939 = vrot.lane.b32.xlu0 %v483, 80
        %v1940 = vpop.permute.xlu0 %1939
        %1941 = vrot.lane.b32.xlu0 %v488, 80
        %v1942 = vpop.permute.xlu0 %1941
        %1943 = vrot.lane.b32.xlu0 %v493, 80
        %v1944 = vpop.permute.xlu0 %1943
        %1945 = vrot.lane.b32.xlu0 %v498, 80
        %v1946 = vpop.permute.xlu0 %1945
        %1947 = vrot.lane.b32.xlu0 %v503, 80
        %v1948 = vpop.permute.xlu0 %1947
        %1949 = vrot.lane.b32.xlu0 %v508, 80
        %v1950 = vpop.permute.xlu0 %1949
        %1951 = vrot.lane.b32.xlu0 %v513, 80
        %v1952 = vpop.permute.xlu0 %1951
        %1953 = vrot.lane.b32.xlu0 %v518, 80
        %v1954 = vpop.permute.xlu0 %1953
        %1955 = vrot.lane.b32.xlu0 %v523, 80
        %v1956 = vpop.permute.xlu0 %1955
        %1957 = vrot.lane.b32.xlu0 %v528, 80
        %v1958 = vpop.permute.xlu0 %1957
        %1959 = vrot.lane.b32.xlu0 %v533, 80
        %v1960 = vpop.permute.xlu0 %1959
        %1961 = vrot.lane.b32.xlu0 %v538, 80
        %v1962 = vpop.permute.xlu0 %1961
        %1963 = vrot.lane.b32.xlu0 %v543, 80
        %v1964 = vpop.permute.xlu0 %1963
        %v1965 = vsel %vm352, %v1934, 0
        %v1967 = vsel %vm352, %v1936, 0
        %v1969 = vsel %vm352, %v1938, 0
        %v1971 = vsel %vm352, %v1940, 0
        %v1973 = vsel %vm352, %v1942, 0
        %v1975 = vsel %vm352, %v1944, 0
        %v1977 = vsel %vm352, %v1946, 0
        %v1979 = vsel %vm352, %v1948, 0
        %v1981 = vsel %vm352, %v1950, 0
        %v1983 = vsel %vm352, %v1952, 0
        %v1985 = vsel %vm352, %v1954, 0
        %v1987 = vsel %vm352, %v1956, 0
        %v1989 = vsel %vm352, %v1958, 0
        %v1991 = vsel %vm352, %v1960, 0
        %v1993 = vsel %vm352, %v1962, 0
        %v1995 = vsel %vm352, %v1964, 0
        %1997 = vmatprep.subr.mxu0 0.0
        %1998 = vmatpush1.xpose.msra.mxu0 %v595
        %1999 = vmatprep.subr.mxu0 0.0
        %2000 = vmatpush1.xpose.msra.mxu0 %v598
        %2001 = vmatprep.subr.mxu0 0.0
        %2002 = vmatpush1.xpose.msra.mxu0 %v601
        %2003 = vmatprep.subr.mxu0 0.0
        %2004 = vmatpush1.xpose.msra.mxu0 %v604
        %2005 = vmatprep.subr.mxu0 0.0
        %2006 = vmatpush1.xpose.msra.mxu0 %v607
        %2007 = vmatprep.subr.mxu0 0.0
        %2008 = vmatpush1.xpose.msra.mxu0 %v610
        %2009 = vmatprep.subr.mxu0 0.0
        %2010 = vmatpush1.xpose.msra.mxu0 %v613
        %2011 = vmatprep.subr.mxu0 0.0
        %2012 = vmatpush1.xpose.msra.mxu0 %v616
        %2013 = vmatprep.subr.mxu0 0.0
        %2014 = vmatpush1.xpose.msra.mxu0 %v619
        %2015 = vmatprep.subr.mxu0 0.0
        %2016 = vmatpush1.xpose.msra.mxu0 %v622
        %2017 = vmatprep.subr.mxu0 0.0
        %2018 = vmatpush1.xpose.msra.mxu0 %v625
        %2019 = vmatprep.subr.mxu0 0.0
        %2020 = vmatpush1.xpose.msra.mxu0 %v628
        %2021 = vmatprep.subr.mxu0 0.0
        %2022 = vmatpush1.xpose.msra.mxu0 %v631
        %2023 = vmatprep.subr.mxu0 0.0
        %2024 = vmatpush1.xpose.msra.mxu0 %v634
        %2025 = vmatprep.subr.mxu0 0.0
        %2026 = vmatpush1.xpose.msra.mxu0 %v637
        %2027 = vmatprep.subr.mxu0 0.0
        %2028 = vmatpush1.xpose.msra.mxu0 %v640
        %2029 = vmatprep.subr.mxu0 0.0
        %2030 = vmatpush1.xpose.msra.mxu0 0.0
        %2031 = vmatprep.subr.mxu0 0.0
        %2032 = vmatpush1.xpose.msra.mxu0 0.0
        %2033 = vmatprep.subr.mxu0 0.0
        %2034 = vmatpush1.xpose.msra.mxu0 0.0
        %2035 = vmatprep.subr.mxu0 0.0
        %2036 = vmatpush1.xpose.msra.mxu0 0.0
        %2037 = vmatprep.subr.mxu0 0.0
        %2038 = vmatpush1.xpose.msra.mxu0 0.0
        %2039 = vmatprep.subr.mxu0 0.0
        %2040 = vmatpush1.xpose.msra.mxu0 0.0
        %2041 = vmatprep.subr.mxu0 0.0
        %2042 = vmatpush1.xpose.msra.mxu0 0.0
        %2043 = vmatprep.subr.mxu0 0.0
        %2044 = vmatpush1.xpose.msra.mxu0 0.0
        %2045 = vmatprep.subr.mxu0 0.0
        %2046 = vmatpush1.xpose.msra.mxu0 0.0
        %2047 = vmatprep.subr.mxu0 0.0
        %2048 = vmatpush1.xpose.msra.mxu0 0.0
        %2049 = vmatprep.subr.mxu0 0.0
        %2050 = vmatpush1.xpose.msra.mxu0 0.0
        %2051 = vmatprep.subr.mxu0 0.0
        %2052 = vmatpush1.xpose.msra.mxu0 0.0
        %2053 = vmatprep.subr.mxu0 0.0
        %2054 = vmatpush1.xpose.msra.mxu0 0.0
        %2055 = vmatprep.subr.mxu0 0.0
        %2056 = vmatpush1.xpose.msra.mxu0 0.0
        %2057 = vmatprep.subr.mxu0 0.0
        %2058 = vmatpush1.xpose.msra.mxu0 0.0
        %2059 = vmatprep.subr.mxu0 0.0
        %2060 = vmatpush1.xpose.msra.mxu0 0.0
        %2061 = vmatprep.mubr.f32.mxu0 0.0
        %2062 = vmatmul.mubr.f32.gmra.mrb[0].mxu0 %v1965
        %v2063 = vpop.f32.mrb[0].mxu0
        %v2064 = vadd.f32 0.0, %v2063
        %v2065 = vpop.f32.mrb[0].mxu0
        %2066 = vmatprep.mubr.f32.mxu0 0.0
        %2067 = vmatmul.mubr.f32.gmra.mrb[0].mxu0 %v1967
        %v2068 = vpop.f32.mrb[0].mxu0
        %v2069 = vadd.f32 0.0, %v2068
        %v2070 = vpop.f32.mrb[0].mxu0
        %2071 = vmatprep.mubr.f32.mxu0 0.0
        %2072 = vmatmul.mubr.f32.gmra.mrb[0].mxu0 %v1969
        %v2073 = vpop.f32.mrb[0].mxu0
        %v2074 = vadd.f32 0.0, %v2073
        %v2075 = vpop.f32.mrb[0].mxu0
        %2076 = vmatprep.mubr.f32.mxu0 0.0
        %2077 = vmatmul.mubr.f32.gmra.mrb[0].mxu0 %v1971
        %v2078 = vpop.f32.mrb[0].mxu0
        %v2079 = vadd.f32 0.0, %v2078
        %v2080 = vpop.f32.mrb[0].mxu0
        %2081 = vmatprep.mubr.f32.mxu0 0.0
        %2082 = vmatmul.mubr.f32.gmra.mrb[0].mxu0 %v1973
        %v2083 = vpop.f32.mrb[0].mxu0
        %v2084 = vadd.f32 0.0, %v2083
        %v2085 = vpop.f32.mrb[0].mxu0
        %2086 = vmatprep.mubr.f32.mxu0 0.0
        %2087 = vmatmul.mubr.f32.gmra.mrb[0].mxu0 %v1975
        %v2088 = vpop.f32.mrb[0].mxu0
        %v2089 = vadd.f32 0.0, %v2088
        %v2090 = vpop.f32.mrb[0].mxu0
        %2091 = vmatprep.mubr.f32.mxu0 0.0
        %2092 = vmatmul.mubr.f32.gmra.mrb[0].mxu0 %v1977
        %v2093 = vpop.f32.mrb[0].mxu0
        %v2094 = vadd.f32 0.0, %v2093
        %v2095 = vpop.f32.mrb[0].mxu0
        %2096 = vmatprep.mubr.f32.mxu0 0.0
        %2097 = vmatmul.mubr.f32.gmra.mrb[0].mxu0 %v1979
        %v2098 = vpop.f32.mrb[0].mxu0
        %v2099 = vadd.f32 0.0, %v2098
        %v2100 = vpop.f32.mrb[0].mxu0
        %2101 = vmatprep.mubr.f32.mxu0 0.0
        %2102 = vmatmul.mubr.f32.gmra.mrb[0].mxu0 %v1981
        %v2103 = vpop.f32.mrb[0].mxu0
        %v2104 = vadd.f32 0.0, %v2103
        %v2105 = vpop.f32.mrb[0].mxu0
        %2106 = vmatprep.mubr.f32.mxu0 0.0
        %2107 = vmatmul.mubr.f32.gmra.mrb[0].mxu0 %v1983
        %v2108 = vpop.f32.mrb[0].mxu0
        %v2109 = vadd.f32 0.0, %v2108
        %v2110 = vpop.f32.mrb[0].mxu0
        %2111 = vmatprep.mubr.f32.mxu0 0.0
        %2112 = vmatmul.mubr.f32.gmra.mrb[0].mxu0 %v1985
        %v2113 = vpop.f32.mrb[0].mxu0
        %v2114 = vadd.f32 0.0, %v2113
        %v2115 = vpop.f32.mrb[0].mxu0
        %2116 = vmatprep.mubr.f32.mxu0 0.0
        %2117 = vmatmul.mubr.f32.gmra.mrb[0].mxu0 %v1987
        %v2118 = vpop.f32.mrb[0].mxu0
        %v2119 = vadd.f32 0.0, %v2118
        %v2120 = vpop.f32.mrb[0].mxu0
        %2121 = vmatprep.mubr.f32.mxu0 0.0
        %2122 = vmatmul.mubr.f32.gmra.mrb[0].mxu0 %v1989
        %v2123 = vpop.f32.mrb[0].mxu0
        %v2124 = vadd.f32 0.0, %v2123
        %v2125 = vpop.f32.mrb[0].mxu0
        %2126 = vmatprep.mubr.f32.mxu0 0.0
        %2127 = vmatmul.mubr.f32.gmra.mrb[0].mxu0 %v1991
        %v2128 = vpop.f32.mrb[0].mxu0
        %v2129 = vadd.f32 0.0, %v2128
        %v2130 = vpop.f32.mrb[0].mxu0
        %2131 = vmatprep.mubr.f32.mxu0 0.0
        %2132 = vmatmul.mubr.f32.gmra.mrb[0].mxu0 %v1993
        %v2133 = vpop.f32.mrb[0].mxu0
        %v2134 = vadd.f32 0.0, %v2133
        %v2135 = vpop.f32.mrb[0].mxu0
        %2136 = vmatprep.mubr.f32.mxu0 0.0
        %2137 = vmatmul.mubr.f32.gmra.mrb[0].mxu0 %v1995
        %v2138 = vpop.f32.mrb[0].mxu0
        %v2139 = vadd.f32 0.0, %v2138
        %v2140 = vpop.f32.mrb[0].mxu0
        %2141 = vdwg.mxu0
        %s2142 = scalar_lea.vmem %s289, 768 [#allocation5]
        %2143 = vst [vmem:[%s2142] sm:$0xff] %v2064
        %2144 = vst [vmem:[%s2142 + $0x8] sm:$0xff] %v2069
        %2145 = vst [vmem:[%s2142 + $0x10] sm:$0xff] %v2074
        %2146 = vst [vmem:[%s2142 + $0x18] sm:$0xff] %v2079
        %2147 = vst [vmem:[%s2142 + $0x20] sm:$0xff] %v2084
        %2148 = vst [vmem:[%s2142 + $0x28] sm:$0xff] %v2089
        %2149 = vst [vmem:[%s2142 + $0x30] sm:$0xff] %v2094
        %2150 = vst [vmem:[%s2142 + $0x38] sm:$0xff] %v2099
        %2151 = vst [vmem:[%s2142 + $0x40] sm:$0xff] %v2104
        %2152 = vst [vmem:[%s2142 + $0x48] sm:$0xff] %v2109
        %2153 = vst [vmem:[%s2142 + $0x50] sm:$0xff] %v2114
        %2154 = vst [vmem:[%s2142 + $0x58] sm:$0xff] %v2119
        %2155 = vst [vmem:[%s2142 + $0x60] sm:$0xff] %v2124
        %2156 = vst [vmem:[%s2142 + $0x68] sm:$0xff] %v2129
        %2157 = vst [vmem:[%s2142 + $0x70] sm:$0xff] %v2134
        %2158 = vst [vmem:[%s2142 + $0x78] sm:$0xff] %v2139
        %2159 = vrot.lane.b32.xlu0 %v468, 72
        %v2160 = vpop.permute.xlu0 %2159
        %2161 = vrot.lane.b32.xlu0 %v473, 72
        %v2162 = vpop.permute.xlu0 %2161
        %2163 = vrot.lane.b32.xlu0 %v478, 72
        %v2164 = vpop.permute.xlu0 %2163
        %2165 = vrot.lane.b32.xlu0 %v483, 72
        %v2166 = vpop.permute.xlu0 %2165
        %2167 = vrot.lane.b32.xlu0 %v488, 72
        %v2168 = vpop.permute.xlu0 %2167
        %2169 = vrot.lane.b32.xlu0 %v493, 72
        %v2170 = vpop.permute.xlu0 %2169
        %2171 = vrot.lane.b32.xlu0 %v498, 72
        %v2172 = vpop.permute.xlu0 %2171
        %2173 = vrot.lane.b32.xlu0 %v503, 72
        %v2174 = vpop.permute.xlu0 %2173
        %2175 = vrot.lane.b32.xlu0 %v508, 72
        %v2176 = vpop.permute.xlu0 %2175
        %2177 = vrot.lane.b32.xlu0 %v513, 72
        %v2178 = vpop.permute.xlu0 %2177
        %2179 = vrot.lane.b32.xlu0 %v518, 72
        %v2180 = vpop.permute.xlu0 %2179
        %2181 = vrot.lane.b32.xlu0 %v523, 72
        %v2182 = vpop.permute.xlu0 %2181
        %2183 = vrot.lane.b32.xlu0 %v528, 72
        %v2184 = vpop.permute.xlu0 %2183
        %2185 = vrot.lane.b32.xlu0 %v533, 72
        %v2186 = vpop.permute.xlu0 %2185
        %2187 = vrot.lane.b32.xlu0 %v538, 72
        %v2188 = vpop.permute.xlu0 %2187
        %2189 = vrot.lane.b32.xlu0 %v543, 72
        %v2190 = vpop.permute.xlu0 %2189
        %v2191 = vsel %vm352, %v2160, 0
        %v2193 = vsel %vm352, %v2162, 0
        %v2195 = vsel %vm352, %v2164, 0
        %v2197 = vsel %vm352, %v2166, 0
        %v2199 = vsel %vm352, %v2168, 0
        %v2201 = vsel %vm352, %v2170, 0
        %v2203 = vsel %vm352, %v2172, 0
        %v2205 = vsel %vm352, %v2174, 0
        %v2207 = vsel %vm352, %v2176, 0
        %v2209 = vsel %vm352, %v2178, 0
        %v2211 = vsel %vm352, %v2180, 0
        %v2213 = vsel %vm352, %v2182, 0
        %v2215 = vsel %vm352, %v2184, 0
        %v2217 = vsel %vm352, %v2186, 0
        %v2219 = vsel %vm352, %v2188, 0
        %v2221 = vsel %vm352, %v2190, 0
        %2223 = vmatprep.subr.mxu0 0.0
        %2224 = vmatpush1.xpose.msra.mxu0 %v595
        %2225 = vmatprep.subr.mxu0 0.0
        %2226 = vmatpush1.xpose.msra.mxu0 %v598
        %2227 = vmatprep.subr.mxu0 0.0
        %2228 = vmatpush1.xpose.msra.mxu0 %v601
        %2229 = vmatprep.subr.mxu0 0.0
        %2230 = vmatpush1.xpose.msra.mxu0 %v604
        %2231 = vmatprep.subr.mxu0 0.0
        %2232 = vmatpush1.xpose.msra.mxu0 %v607
        %2233 = vmatprep.subr.mxu0 0.0
        %2234 = vmatpush1.xpose.msra.mxu0 %v610
        %2235 = vmatprep.subr.mxu0 0.0
        %2236 = vmatpush1.xpose.msra.mxu0 %v613
        %2237 = vmatprep.subr.mxu0 0.0
        %2238 = vmatpush1.xpose.msra.mxu0 %v616
        %2239 = vmatprep.subr.mxu0 0.0
        %2240 = vmatpush1.xpose.msra.mxu0 %v619
        %2241 = vmatprep.subr.mxu0 0.0
        %2242 = vmatpush1.xpose.msra.mxu0 %v622
        %2243 = vmatprep.subr.mxu0 0.0
        %2244 = vmatpush1.xpose.msra.mxu0 %v625
        %2245 = vmatprep.subr.mxu0 0.0
        %2246 = vmatpush1.xpose.msra.mxu0 %v628
        %2247 = vmatprep.subr.mxu0 0.0
        %2248 = vmatpush1.xpose.msra.mxu0 %v631
        %2249 = vmatprep.subr.mxu0 0.0
        %2250 = vmatpush1.xpose.msra.mxu0 %v634
        %2251 = vmatprep.subr.mxu0 0.0
        %2252 = vmatpush1.xpose.msra.mxu0 %v637
        %2253 = vmatprep.subr.mxu0 0.0
        %2254 = vmatpush1.xpose.msra.mxu0 %v640
        %2255 = vmatprep.subr.mxu0 0.0
        %2256 = vmatpush1.xpose.msra.mxu0 0.0
        %2257 = vmatprep.subr.mxu0 0.0
        %2258 = vmatpush1.xpose.msra.mxu0 0.0
        %2259 = vmatprep.subr.mxu0 0.0
        %2260 = vmatpush1.xpose.msra.mxu0 0.0
        %2261 = vmatprep.subr.mxu0 0.0
        %2262 = vmatpush1.xpose.msra.mxu0 0.0
        %2263 = vmatprep.subr.mxu0 0.0
        %2264 = vmatpush1.xpose.msra.mxu0 0.0
        %2265 = vmatprep.subr.mxu0 0.0
        %2266 = vmatpush1.xpose.msra.mxu0 0.0
        %2267 = vmatprep.subr.mxu0 0.0
        %2268 = vmatpush1.xpose.msra.mxu0 0.0
        %2269 = vmatprep.subr.mxu0 0.0
        %2270 = vmatpush1.xpose.msra.mxu0 0.0
        %2271 = vmatprep.subr.mxu0 0.0
        %2272 = vmatpush1.xpose.msra.mxu0 0.0
        %2273 = vmatprep.subr.mxu0 0.0
        %2274 = vmatpush1.xpose.msra.mxu0 0.0
        %2275 = vmatprep.subr.mxu0 0.0
        %2276 = vmatpush1.xpose.msra.mxu0 0.0
        %2277 = vmatprep.subr.mxu0 0.0
        %2278 = vmatpush1.xpose.msra.mxu0 0.0
        %2279 = vmatprep.subr.mxu0 0.0
        %2280 = vmatpush1.xpose.msra.mxu0 0.0
        %2281 = vmatprep.subr.mxu0 0.0
        %2282 = vmatpush1.xpose.msra.mxu0 0.0
        %2283 = vmatprep.subr.mxu0 0.0
        %2284 = vmatpush1.xpose.msra.mxu0 0.0
        %2285 = vmatprep.subr.mxu0 0.0
        %2286 = vmatpush1.xpose.msra.mxu0 0.0
        %2287 = vmatprep.mubr.f32.mxu0 0.0
        %2288 = vmatmul.mubr.f32.gmra.mrb[0].mxu0 %v2191
        %v2289 = vpop.f32.mrb[0].mxu0
        %v2290 = vadd.f32 0.0, %v2289
        %v2291 = vpop.f32.mrb[0].mxu0
        %2292 = vmatprep.mubr.f32.mxu0 0.0
        %2293 = vmatmul.mubr.f32.gmra.mrb[0].mxu0 %v2193
        %v2294 = vpop.f32.mrb[0].mxu0
        %v2295 = vadd.f32 0.0, %v2294
        %v2296 = vpop.f32.mrb[0].mxu0
        %2297 = vmatprep.mubr.f32.mxu0 0.0
        %2298 = vmatmul.mubr.f32.gmra.mrb[0].mxu0 %v2195
        %v2299 = vpop.f32.mrb[0].mxu0
        %v2300 = vadd.f32 0.0, %v2299
        %v2301 = vpop.f32.mrb[0].mxu0
        %2302 = vmatprep.mubr.f32.mxu0 0.0
        %2303 = vmatmul.mubr.f32.gmra.mrb[0].mxu0 %v2197
        %v2304 = vpop.f32.mrb[0].mxu0
        %v2305 = vadd.f32 0.0, %v2304
        %v2306 = vpop.f32.mrb[0].mxu0
        %2307 = vmatprep.mubr.f32.mxu0 0.0
        %2308 = vmatmul.mubr.f32.gmra.mrb[0].mxu0 %v2199
        %v2309 = vpop.f32.mrb[0].mxu0
        %v2310 = vadd.f32 0.0, %v2309
        %v2311 = vpop.f32.mrb[0].mxu0
        %2312 = vmatprep.mubr.f32.mxu0 0.0
        %2313 = vmatmul.mubr.f32.gmra.mrb[0].mxu0 %v2201
        %v2314 = vpop.f32.mrb[0].mxu0
        %v2315 = vadd.f32 0.0, %v2314
        %v2316 = vpop.f32.mrb[0].mxu0
        %2317 = vmatprep.mubr.f32.mxu0 0.0
        %2318 = vmatmul.mubr.f32.gmra.mrb[0].mxu0 %v2203
        %v2319 = vpop.f32.mrb[0].mxu0
        %v2320 = vadd.f32 0.0, %v2319
        %v2321 = vpop.f32.mrb[0].mxu0
        %2322 = vmatprep.mubr.f32.mxu0 0.0
        %2323 = vmatmul.mubr.f32.gmra.mrb[0].mxu0 %v2205
        %v2324 = vpop.f32.mrb[0].mxu0
        %v2325 = vadd.f32 0.0, %v2324
        %v2326 = vpop.f32.mrb[0].mxu0
        %2327 = vmatprep.mubr.f32.mxu0 0.0
        %2328 = vmatmul.mubr.f32.gmra.mrb[0].mxu0 %v2207
        %v2329 = vpop.f32.mrb[0].mxu0
        %v2330 = vadd.f32 0.0, %v2329
        %v2331 = vpop.f32.mrb[0].mxu0
        %2332 = vmatprep.mubr.f32.mxu0 0.0
        %2333 = vmatmul.mubr.f32.gmra.mrb[0].mxu0 %v2209
        %v2334 = vpop.f32.mrb[0].mxu0
        %v2335 = vadd.f32 0.0, %v2334
        %v2336 = vpop.f32.mrb[0].mxu0
        %2337 = vmatprep.mubr.f32.mxu0 0.0
        %2338 = vmatmul.mubr.f32.gmra.mrb[0].mxu0 %v2211
        %v2339 = vpop.f32.mrb[0].mxu0
        %v2340 = vadd.f32 0.0, %v2339
        %v2341 = vpop.f32.mrb[0].mxu0
        %2342 = vmatprep.mubr.f32.mxu0 0.0
        %2343 = vmatmul.mubr.f32.gmra.mrb[0].mxu0 %v2213
        %v2344 = vpop.f32.mrb[0].mxu0
        %v2345 = vadd.f32 0.0, %v2344
        %v2346 = vpop.f32.mrb[0].mxu0
        %2347 = vmatprep.mubr.f32.mxu0 0.0
        %2348 = vmatmul.mubr.f32.gmra.mrb[0].mxu0 %v2215
        %v2349 = vpop.f32.mrb[0].mxu0
        %v2350 = vadd.f32 0.0, %v2349
        %v2351 = vpop.f32.mrb[0].mxu0
        %2352 = vmatprep.mubr.f32.mxu0 0.0
        %2353 = vmatmul.mubr.f32.gmra.mrb[0].mxu0 %v2217
        %v2354 = vpop.f32.mrb[0].mxu0
        %v2355 = vadd.f32 0.0, %v2354
        %v2356 = vpop.f32.mrb[0].mxu0
        %2357 = vmatprep.mubr.f32.mxu0 0.0
        %2358 = vmatmul.mubr.f32.gmra.mrb[0].mxu0 %v2219
        %v2359 = vpop.f32.mrb[0].mxu0
        %v2360 = vadd.f32 0.0, %v2359
        %v2361 = vpop.f32.mrb[0].mxu0
        %2362 = vmatprep.mubr.f32.mxu0 0.0
        %2363 = vmatmul.mubr.f32.gmra.mrb[0].mxu0 %v2221
        %v2364 = vpop.f32.mrb[0].mxu0
        %v2365 = vadd.f32 0.0, %v2364
        %v2366 = vpop.f32.mrb[0].mxu0
        %2367 = vdwg.mxu0
        %s2368 = scalar_lea.vmem %s289, 896 [#allocation5]
        %2369 = vst [vmem:[%s2368] sm:$0xff] %v2290
        %2370 = vst [vmem:[%s2368 + $0x8] sm:$0xff] %v2295
        %2371 = vst [vmem:[%s2368 + $0x10] sm:$0xff] %v2300
        %2372 = vst [vmem:[%s2368 + $0x18] sm:$0xff] %v2305
        %2373 = vst [vmem:[%s2368 + $0x20] sm:$0xff] %v2310
        %2374 = vst [vmem:[%s2368 + $0x28] sm:$0xff] %v2315
        %2375 = vst [vmem:[%s2368 + $0x30] sm:$0xff] %v2320
        %2376 = vst [vmem:[%s2368 + $0x38] sm:$0xff] %v2325
        %2377 = vst [vmem:[%s2368 + $0x40] sm:$0xff] %v2330
        %2378 = vst [vmem:[%s2368 + $0x48] sm:$0xff] %v2335
        %2379 = vst [vmem:[%s2368 + $0x50] sm:$0xff] %v2340
        %2380 = vst [vmem:[%s2368 + $0x58] sm:$0xff] %v2345
        %2381 = vst [vmem:[%s2368 + $0x60] sm:$0xff] %v2350
        %2382 = vst [vmem:[%s2368 + $0x68] sm:$0xff] %v2355
        %2383 = vst [vmem:[%s2368 + $0x70] sm:$0xff] %v2360
        %2384 = vst [vmem:[%s2368 + $0x78] sm:$0xff] %v2365
        %s2385 = sand.u32 %s146, 1
        %s2386 = scalar_lea.sflag [#allocation4], %s2385
        %s2387 = sand.u32 %s146, 1
        %s2388 = smul.addr %s2387, 1024
        %s2389 = scalar_lea.vmem [#allocation5], %s2388
        // Predicated region
        $region37: #{tpu_custom_call.1} parent=31 // pred_check
          %p2390 = pneg %p156
        $region38: #{tpu_custom_call.1} parent=31 // pred_check_branch
          %2392 = sbr.rel (%p2390) target = $region40
        $region39: #{tpu_custom_call.1} parent=31 // pred_region
          %s2393 = smul.u32 16, %s28
          %s2395 = ssub.s32 16384, 16384
          %2396 = vsyncadd %s2386, %s2395
          %s2397 = sadd.s32 %s29, %s2393
          %s2398 = smul.addr %s26, 128
          %s2399 = sadd.s32 %s2397, %s2398
          %s2400 = smul.addr %s27, 512
          %s2401 = sadd.s32 %s2399, %s2400
          %s2402 = smul.addr %s2401, 128
          %s2403 = scalar_lea.hbm %s3, %s2402
          %s2404 = sshll.u32 %s2389, 4
          %s2405 = int_to_ptr.vmem [resolvable:$true] %s2404
          %2410 = dma.vmem_to_hbm [thread:$0]  %s2405, 16384, %s2403, %s2386, 128, 128, 8
        $region40: #{tpu_custom_call.1} parent=31 // pred_fallthru
          _
      $region32: #{tpu_custom_call.1} parent=5 // pred_fallthru
        _
      %p2411 = scmp.le.s32.totalorder 2, %s15
      // Predicated region
      $region41: #{tpu_custom_call.1} parent=5 // pred_check
        %p2412 = pneg %p2411
      $region42: #{tpu_custom_call.1} parent=5 // pred_check_branch
        %2414 = sbr.rel (%p2412) target = $region44
      $region43: #{tpu_custom_call.1} parent=5 // pred_region
        %s2415 = ssub.s32 %s15, 2
        // Predicated region
        $region45: #{tpu_custom_call.1} parent=43 // pred_check
          %p2416 = pneg %p162
        $region46: #{tpu_custom_call.1} parent=43 // pred_check_branch
          %2418 = sbr.rel (%p2416) target = $region48
        $region47: #{tpu_custom_call.1} parent=43 // pred_region
          %s2419 = sand.u32 %s147, 1
          %s2420 = scalar_lea.sflag [#allocation4], %s2419
          %s2421 = sand.u32 %s147, 1
          %s2422 = smul.addr %s2421, 1024
          %s2423 = scalar_lea.vmem [#allocation5], %s2422
          %2424 = dma.done %s2420, 16384
        $region48: #{tpu_custom_call.1} parent=43 // pred_fallthru
          _
      $region44: #{tpu_custom_call.1} parent=5 // pred_fallthru
        _
    $region6: #{tpu_custom_call.1} parent=1 // loop_footer
      %s19 = sadd.s32 1, %s15
    $region7: #{tpu_custom_call.1} parent=1 // loop_footer_branch
      %14 = sbr.rel target = $region3
    $region8: #{tpu_custom_call.1} parent=1 // loop_exit
      _
    %2425 = vsyncpa [#allocation3], 1
    %s2426 = scalar_lea.sflag [#allocation3], 1
    %2427 = vsyncpa %s2426, 1
    %2428 = vsyncpa [#allocation4], 1
    %s2429 = scalar_lea.sflag [#allocation4], 1
    %2430 = vsyncpa %s2429, 1

</llo_original>
